<compile_context>
chip_gen: v6e
topology: v6e:2x2x1
jax: 0.10.0
libtpu: 0.0.40
codegen_flags: <defaults>
</compile_context>

<pallas_src>
import functools

import jax
import jax.numpy as jnp
from jax.experimental import pallas as pl
from jax.experimental.pallas import tpu as pltpu

KT, KF = 4, 3     # conv kernel (time, freq) — module defaults
PAD_T = 3         # causal zero padding rows (top) for both convs


def _encoder_block_kernel(xe_ref, xo_ref, w1_ref, sh1_ref, w2_ref, sh2_ref,
                          o_ref, work1, work2):
    """Fused EncoderBlock for one (batch, time-tile) grid step.

    xe_ref, xo_ref : (1, tT, F_out, Cin)   even / odd frequency columns of x
    w1_ref         : (KT, KF*Cin,  Cout)   BN1-scale-folded conv1 weights, K ordered (kf, ci)
    w2_ref         : (KT, KF*Cout, Cout)   BN2-scale-folded residual conv weights
    sh*_ref        : (1, Cout)             folded BN shift (conv bias / running stats folded in)
    o_ref          : (1, Cout, tT*F_out)   NCHW-flat output tile (lane-dense store)
    work1, work2   : VMEM (tT+3, F_out, KF*C) f32 im2col work buffers; their first 3 rows
                     persist across time tiles and implement the causal T padding.
    """
    ti = pl.program_id(1)
    tT, F_out, Cin = xe_ref.shape[1], xe_ref.shape[2], xe_ref.shape[3]
    Cout = o_ref.shape[1]
    M = tT * F_out
    mxu_dtype = w1_ref.dtype          # f32 or bf16 (set by the wrapper)

    # ---- per-batch init (first time tile): zero causal-T halo + the constant zero
    #      frequency-pad tap columns (those columns are never overwritten later, and the
    #      halo carry below copies them forward, so once per batch item is enough). ----
    @pl.when(ti == 0)
    def _init():
        work1[0:PAD_T] = jnp.zeros((PAD_T, F_out, KF * Cin), jnp.float32)
        work2[0:PAD_T] = jnp.zeros((PAD_T, F_out, KF * Cout), jnp.float32)
        work1[PAD_T:, 0:1, 0:Cin] = jnp.zeros((tT, 1, Cin), jnp.float32)           # f-1 @ f=0
        work2[PAD_T:, 0:1, 0:Cout] = jnp.zeros((tT, 1, Cout), jnp.float32)         # f-1 @ f=0
        work2[PAD_T:, F_out - 1:, 2 * Cout:] = jnp.zeros((tT, 1, Cout), jnp.float32)  # f+1 @ f=F-1

    @pl.when(ti > 0)
    def _carry_halo():
        # causal-T halo: last 3 time rows of the previous tile (already in tap layout)
        work1[0:PAD_T] = work1[tT:tT + PAD_T]
        work2[0:PAD_T] = work2[tT:tT + PAD_T]

    # ---- stage 1: Conv2d(Cin, Cout, k=(4,3), stride=(1,2)) + BN1 + ELU ------------
    # Frequency taps of the stride-2 conv, grouped on the lane axis of work1:
    #   lanes [0,Cin)      <- original column 2f-1  (zero for f == 0: left ZeroPad)
    #   lanes [Cin,2Cin)   <- original column 2f    (= xe)
    #   lanes [2Cin,3Cin)  <- original column 2f+1  (= xo)
    xe = xe_ref[0].astype(jnp.float32)
    xo = xo_ref[0].astype(jnp.float32)
    work1[PAD_T:, :, Cin:2 * Cin] = xe
    work1[PAD_T:, :, 2 * Cin:] = xo
    work1[PAD_T:, 1:, 0:Cin] = xo[:, :F_out - 1, :]

    # 4 MXU matmuls (one per time tap) with K = KF*Cin instead of 12 with K = Cin.
    acc1 = jnp.zeros((M, Cout), jnp.float32)
    for kt in range(KT):
        lhs = work1[kt:kt + tT].reshape(M, KF * Cin).astype(mxu_dtype)
        acc1 = acc1 + jnp.dot(lhs, w1_ref[kt],
                              preferred_element_type=jnp.float32)

    z1 = acc1 + sh1_ref[...]                          # BN1 scale folded into w1, shift here
    h = jnp.where(z1 > 0, z1, jnp.exp(z1) - 1.0)      # ELU, f32, shape (M, Cout)

    # ---- stage 2: ResidualBlock conv (k=(4,3), stride 1) + BN2 + ELU + residual ---
    h3 = h.reshape(tT, F_out, Cout)
    work2[PAD_T:, :, Cout:2 * Cout] = h3                               # column f
    work2[PAD_T:, 1:, 0:Cout] = h3[:, :F_out - 1, :]                   # column f-1
    work2[PAD_T:, :F_out - 1, 2 * Cout:] = h3[:, 1:, :]                # column f+1

    acc2 = jnp.zeros((M, Cout), jnp.float32)
    for kt in range(KT):
        lhs = work2[kt:kt + tT].reshape(M, KF * Cout).astype(mxu_dtype)
        acc2 = acc2 + jnp.dot(lhs, w2_ref[kt],
                              preferred_element_type=jnp.float32)

    z2 = acc2 + sh2_ref[...]
    y = jnp.where(z2 > 0, z2, jnp.exp(z2) - 1.0)

    # Residual add in f32, then a single lane-dense (Cout, tT*F_out) store that is
    # already flattened NCHW -> no output transpose in the wrapper, no masked narrow
    # vst on a C-wide last dim.
    o_ref[0] = (y + h).T.astype(o_ref.dtype)


@functools.partial(jax.jit, static_argnames=("compute_dtype", "t_tile"))
def encoder_block(x, w1, b1, g1, be1, m1, v1, w2, b2, g2, be2, m2, v2,
                  *, eps=1e-5, compute_dtype=jnp.float32, t_tile=None):
    """x: (B, Cin, T, F) float32 NCHW.  Returns (B, Cout, T, F//2) float32."""
    B, Cin, T, F = x.shape
    Cout = w1.shape[0]
    assert w1.shape == (Cout, Cin, KT, KF)
    assert w2.shape == (Cout, Cout, KT, KF)
    assert F % 2 == 0, "TODO(synk): odd F not supported"
    F_out = F // 2

    # ---- time tiling (keeps per-block VMEM small; budgeted for v7x's 64 MiB) ------
    tT = T if t_tile is None else min(int(t_tile), T)
    assert tT >= 4
    nT = -(-T // tT)
    Tp = nT * tT
    # the flattened NCHW output block keeps its lane dim full or 128-aligned
    assert nT == 1 or (tT * F_out) % 128 == 0, \
        "pick t_tile so that t_tile * (F // 2) is a multiple of 128"

    # ---- layout plumbing in the wrapper (XLA handles this well) -------------------
    x_t = jnp.transpose(x, (0, 2, 3, 1))                         # (B, T, F, Cin)
    if Tp != T:
        x_t = jnp.pad(x_t, ((0, 0), (0, Tp - T), (0, 0), (0, 0)))
    # even / odd frequency columns: the stride-2 conv taps become plain slices, so the
    # kernel never needs a padded HBM copy of x or strided loads.
    xe = x_t[:, :, 0::2, :].astype(compute_dtype)                # column 2f
    xo = x_t[:, :, 1::2, :].astype(compute_dtype)                # column 2f+1

    # fold conv bias + eval-mode BatchNorm into the conv weights (scale) and a
    # per-channel shift:  BN(conv(x)+b) = conv(x, w*s) + ((b - mean)*s + beta)
    s1 = g1 / jnp.sqrt(v1 + eps)
    s2 = g2 / jnp.sqrt(v2 + eps)
    sh1 = (be1 + (b1 - m1) * s1).reshape(1, Cout).astype(jnp.float32)
    sh2 = (be2 + (b2 - m2) * s2).reshape(1, Cout).astype(jnp.float32)
    w1f = (w1 * s1[:, None, None, None]).astype(jnp.float32)
    w2f = (w2 * s2[:, None, None, None]).astype(jnp.float32)

    # conv weights OIHW -> (KT, KF*C, Cout), K ordered (kf, ci) to match the taps
    w1r = jnp.transpose(w1f, (2, 3, 1, 0)).reshape(KT, KF * Cin, Cout).astype(compute_dtype)
    w2r = jnp.transpose(w2f, (2, 3, 1, 0)).reshape(KT, KF * Cout, Cout).astype(compute_dtype)

    out_flat = pl.pallas_call(
        _encoder_block_kernel,
        out_shape=jax.ShapeDtypeStruct((B, Cout, Tp * F_out), jnp.float32),
        grid_spec=pltpu.PrefetchScalarGridSpec(
            num_scalar_prefetch=0,
            grid=(B, nT),
            in_specs=[
                pl.BlockSpec((1, tT, F_out, Cin), lambda b, t: (b, t, 0, 0)),
                pl.BlockSpec((1, tT, F_out, Cin), lambda b, t: (b, t, 0, 0)),
                pl.BlockSpec((KT, KF * Cin, Cout), lambda b, t: (0, 0, 0)),
                pl.BlockSpec((1, Cout), lambda b, t: (0, 0)),
                pl.BlockSpec((KT, KF * Cout, Cout), lambda b, t: (0, 0, 0)),
                pl.BlockSpec((1, Cout), lambda b, t: (0, 0)),
            ],
            out_specs=pl.BlockSpec((1, Cout, tT * F_out), lambda b, t: (b, 0, t)),
            scratch_shapes=[
                pltpu.VMEM((tT + PAD_T, F_out, KF * Cin), jnp.float32),
                pltpu.VMEM((tT + PAD_T, F_out, KF * Cout), jnp.float32),
            ],
        ),
        compiler_params=pltpu.CompilerParams(
            # B is independent (megacore-parallel); the T axis carries the 3-row
            # causal halo across tiles, so it must stay sequential.
            dimension_semantics=("parallel", "arbitrary"),
            vmem_limit_bytes=32 * 1024 * 1024,
        ),
    )(xe, xo, w1r, sh1, w2r, sh2)

    out = out_flat.reshape(B, Cout, Tp, F_out)   # already NCHW, no transpose needed
    if Tp != T:
        out = out[:, :, :T, :]
    return out


def _reference(x, w1, b1, g1, be1, m1, v1, w2, b2, g2, be2, m2, v2, eps=1e-5):
    """Plain-JAX (XLA conv) reference for correctness checking."""
    def conv_bn_elu(inp, w, b, g, be, m, v, stride_f):
        xp = jnp.pad(inp, ((0, 0), (0, 0), (PAD_T, 0), (1, 1)))
        y = jax.lax.conv_general_dilated(
            xp, w, window_strides=(1, stride_f), padding="VALID",
            dimension_numbers=("NCHW", "OIHW", "NCHW"))
        y = y + b[None, :, None, None]
        s = g / jnp.sqrt(v + eps)
        y = (y - m[None, :, None, None]) * s[None, :, None, None] + be[None, :, None, None]
        return jnp.where(y > 0, y, jnp.exp(y) - 1.0)

    h = conv_bn_elu(x, w1, b1, g1, be1, m1, v1, 2)
    y = conv_bn_elu(h, w2, b2, g2, be2, m2, v2, 1)
    return y + h


if __name__ == "__main__":
    B, Cin, Cout, T, F = 2, 4, 8, 32, 16

    key = jax.random.PRNGKey(0)
    kx, k1, k2 = jax.random.split(key, 3)
    x = jax.random.normal(kx, (B, Cin, T, F), jnp.float32)

    def conv_bn_params(k, cin, cout):
        kk = jax.random.split(k, 6)
        fan_in = cin * KT * KF
        w = jax.random.normal(kk[0], (cout, cin, KT, KF), jnp.float32) / jnp.sqrt(fan_in)
        b = 0.1 * jax.random.normal(kk[1], (cout,), jnp.float32)
        gamma = 1.0 + 0.1 * jax.random.normal(kk[2], (cout,), jnp.float32)
        beta = 0.1 * jax.random.normal(kk[3], (cout,), jnp.float32)
        mean = 0.05 * jax.random.normal(kk[4], (cout,), jnp.float32)
        var = 1.0 + jax.nn.softplus(jax.random.normal(kk[5], (cout,), jnp.float32))
        return w, b, gamma, beta, mean, var

    p1 = conv_bn_params(k1, Cin, Cout)    # encoder conv + BN1
    p2 = conv_bn_params(k2, Cout, Cout)   # residual conv + BN2

    ref = _reference(x, *p1, *p2)

    # f32 path (two time tiles -> exercises the causal carry across tiles)
    out = encoder_block(x, *p1, *p2, t_tile=16)
    out = jax.block_until_ready(out)
    assert out.shape == (B, Cout, T, F // 2)
    err = jnp.max(jnp.abs(out - ref))
    assert jnp.allclose(out, ref, atol=5e-4, rtol=5e-4), f"f32 max abs diff = {err}"

    # bf16 inputs/weights (HBM + MXU savings on v6e/v7x), f32 accumulation/epilogue
    out_bf = encoder_block(x, *p1, *p2, t_tile=16, compute_dtype=jnp.bfloat16)
    out_bf = jax.block_until_ready(out_bf)
    err_bf = jnp.max(jnp.abs(out_bf - ref))
    assert jnp.allclose(out_bf, ref, atol=0.15, rtol=0.15), f"bf16 max abs diff = {err_bf}"

    print("KERNEL_OK")
</pallas_src>

<mosaic_0001>
module attributes {stable_mosaic.version = 11 : i64} {
  func.func @_encoder_block_kernel(%arg0: i32, %arg1: i32, %arg2: memref<1x16x8x4xf32, #tpu.memory_space<vmem>>, %arg3: memref<1x16x8x4xf32, #tpu.memory_space<vmem>>, %arg4: memref<4x12x8xf32, #tpu.memory_space<vmem>>, %arg5: memref<1x8xf32, #tpu.memory_space<vmem>>, %arg6: memref<4x24x8xf32, #tpu.memory_space<vmem>>, %arg7: memref<1x8xf32, #tpu.memory_space<vmem>>, %arg8: memref<1x8x128xf32, #tpu.memory_space<vmem>>, %arg9: memref<19x8x12xf32, #tpu.memory_space<vmem>>, %arg10: memref<19x8x24xf32, #tpu.memory_space<vmem>>) attributes {dimension_semantics = [#tpu.dimension_semantics<parallel>, #tpu.dimension_semantics<arbitrary>], iteration_bounds = array<i64: 2, 2>, scalar_prefetch = 0 : i64, scratch_operands = 2 : i64, tpu.core_type = #tpu.core_type<tc>, window_params = [{transform_indices = @transform_0, window_bounds = array<i64: 1, 16, 8, 4>}, {transform_indices = @transform_1, window_bounds = array<i64: 1, 16, 8, 4>}, {pipeline_mode = #tpu.pipeline_mode<synchronous>, transform_indices = @transform_2, window_bounds = array<i64: 4, 12, 8>}, {pipeline_mode = #tpu.pipeline_mode<synchronous>, transform_indices = @transform_3, window_bounds = array<i64: 1, 8>}, {pipeline_mode = #tpu.pipeline_mode<synchronous>, transform_indices = @transform_4, window_bounds = array<i64: 4, 24, 8>}, {pipeline_mode = #tpu.pipeline_mode<synchronous>, transform_indices = @transform_5, window_bounds = array<i64: 1, 8>}, {transform_indices = @transform_6, window_bounds = array<i64: 1, 8, 128>}]} {
    %c0_i32 = arith.constant 0 : i32
    %0 = arith.cmpi eq, %arg1, %c0_i32 : i32
    %1 = arith.extui %0 : i1 to i32
    %c0_i32_0 = arith.constant 0 : i32
    %2 = arith.cmpi ne, %1, %c0_i32_0 : i32
    scf.if %2 {
      %cst_90 = arith.constant 0.000000e+00 : f32
      %93 = vector.broadcast %cst_90 : f32 to vector<3x8x12xf32>
      %c0_91 = arith.constant 0 : index
      %c0_92 = arith.constant 0 : index
      %c0_93 = arith.constant 0 : index
      %94 = vector.load %arg9[%c0_91, %c0_92, %c0_93] : memref<19x8x12xf32, #tpu.memory_space<vmem>>, vector<3x8x12xf32>
      tpu.vector_store %arg9[%c0_91, %c0_92, %c0_93], %93 {strides = array<i32>} : memref<19x8x12xf32, #tpu.memory_space<vmem>>, vector<3x8x12xf32>,
      %cst_94 = arith.constant 0.000000e+00 : f32
      %95 = vector.broadcast %cst_94 : f32 to vector<3x8x24xf32>
      %c0_95 = arith.constant 0 : index
      %c0_96 = arith.constant 0 : index
      %c0_97 = arith.constant 0 : index
      %96 = vector.load %arg10[%c0_95, %c0_96, %c0_97] : memref<19x8x24xf32, #tpu.memory_space<vmem>>, vector<3x8x24xf32>
      tpu.vector_store %arg10[%c0_95, %c0_96, %c0_97], %95 {strides = array<i32>} : memref<19x8x24xf32, #tpu.memory_space<vmem>>, vector<3x8x24xf32>,
      %cst_98 = arith.constant 0.000000e+00 : f32
      %97 = vector.broadcast %cst_98 : f32 to vector<16x1x4xf32>
      %c3_99 = arith.constant 3 : index
      %c0_100 = arith.constant 0 : index
      %c0_101 = arith.constant 0 : index
      %98 = vector.load %arg9[%c3_99, %c0_100, %c0_101] : memref<19x8x12xf32, #tpu.memory_space<vmem>>, vector<16x1x4xf32>
      tpu.vector_store %arg9[%c3_99, %c0_100, %c0_101], %97 {strides = array<i32>} : memref<19x8x12xf32, #tpu.memory_space<vmem>>, vector<16x1x4xf32>,
      %cst_102 = arith.constant 0.000000e+00 : f32
      %99 = vector.broadcast %cst_102 : f32 to vector<16x1x8xf32>
      %c3_103 = arith.constant 3 : index
      %c0_104 = arith.constant 0 : index
      %c0_105 = arith.constant 0 : index
      %100 = vector.load %arg10[%c3_103, %c0_104, %c0_105] : memref<19x8x24xf32, #tpu.memory_space<vmem>>, vector<16x1x8xf32>
      tpu.vector_store %arg10[%c3_103, %c0_104, %c0_105], %99 {strides = array<i32>} : memref<19x8x24xf32, #tpu.memory_space<vmem>>, vector<16x1x8xf32>,
      %cst_106 = arith.constant 0.000000e+00 : f32
      %101 = vector.broadcast %cst_106 : f32 to vector<16x1x8xf32>
      %c3_107 = arith.constant 3 : index
      %c7 = arith.constant 7 : index
      %c16_108 = arith.constant 16 : index
      %102 = vector.load %arg10[%c3_107, %c7, %c16_108] : memref<19x8x24xf32, #tpu.memory_space<vmem>>, vector<16x1x8xf32>
      tpu.vector_store %arg10[%c3_107, %c7, %c16_108], %101 {strides = array<i32>} : memref<19x8x24xf32, #tpu.memory_space<vmem>>, vector<16x1x8xf32>,
    } else {
    }
    %c0_i32_1 = arith.constant 0 : i32
    %3 = arith.cmpi sgt, %arg1, %c0_i32_1 : i32
    %4 = arith.extui %3 : i1 to i32
    %c0_i32_2 = arith.constant 0 : i32
    %5 = arith.cmpi ne, %4, %c0_i32_2 : i32
    scf.if %5 {
      %c16_90 = arith.constant 16 : index
      %c0_91 = arith.constant 0 : index
      %c0_92 = arith.constant 0 : index
      %93 = vector.load %arg9[%c16_90, %c0_91, %c0_92] : memref<19x8x12xf32, #tpu.memory_space<vmem>>, vector<3x8x12xf32>
      %c0_93 = arith.constant 0 : index
      %c0_94 = arith.constant 0 : index
      %c0_95 = arith.constant 0 : index
      %94 = vector.load %arg9[%c0_93, %c0_94, %c0_95] : memref<19x8x12xf32, #tpu.memory_space<vmem>>, vector<3x8x12xf32>
      tpu.vector_store %arg9[%c0_93, %c0_94, %c0_95], %93 {strides = array<i32>} : memref<19x8x12xf32, #tpu.memory_space<vmem>>, vector<3x8x12xf32>,
      %c16_96 = arith.constant 16 : index
      %c0_97 = arith.constant 0 : index
      %c0_98 = arith.constant 0 : index
      %95 = vector.load %arg10[%c16_96, %c0_97, %c0_98] : memref<19x8x24xf32, #tpu.memory_space<vmem>>, vector<3x8x24xf32>
      %c0_99 = arith.constant 0 : index
      %c0_100 = arith.constant 0 : index
      %c0_101 = arith.constant 0 : index
      %96 = vector.load %arg10[%c0_99, %c0_100, %c0_101] : memref<19x8x24xf32, #tpu.memory_space<vmem>>, vector<3x8x24xf32>
      tpu.vector_store %arg10[%c0_99, %c0_100, %c0_101], %95 {strides = array<i32>} : memref<19x8x24xf32, #tpu.memory_space<vmem>>, vector<3x8x24xf32>,
    } else {
    }
    %c0 = arith.constant 0 : index
    %c0_3 = arith.constant 0 : index
    %c0_4 = arith.constant 0 : index
    %c0_5 = arith.constant 0 : index
    %6 = vector.load %arg2[%c0, %c0_3, %c0_4, %c0_5] : memref<1x16x8x4xf32, #tpu.memory_space<vmem>>, vector<1x16x8x4xf32>
    %7 = vector.shape_cast %6 : vector<1x16x8x4xf32> to vector<16x8x4xf32>
    %c0_6 = arith.constant 0 : index
    %c0_7 = arith.constant 0 : index
    %c0_8 = arith.constant 0 : index
    %c0_9 = arith.constant 0 : index
    %8 = vector.load %arg3[%c0_6, %c0_7, %c0_8, %c0_9] : memref<1x16x8x4xf32, #tpu.memory_space<vmem>>, vector<1x16x8x4xf32>
    %9 = vector.shape_cast %8 : vector<1x16x8x4xf32> to vector<16x8x4xf32>
    %c3 = arith.constant 3 : index
    %c0_10 = arith.constant 0 : index
    %c4 = arith.constant 4 : index
    %10 = vector.load %arg9[%c3, %c0_10, %c4] : memref<19x8x12xf32, #tpu.memory_space<vmem>>, vector<16x8x4xf32>
    tpu.vector_store %arg9[%c3, %c0_10, %c4], %7 {strides = array<i32>} : memref<19x8x12xf32, #tpu.memory_space<vmem>>, vector<16x8x4xf32>,
    %c3_11 = arith.constant 3 : index
    %c0_12 = arith.constant 0 : index
    %c8 = arith.constant 8 : index
    %11 = vector.load %arg9[%c3_11, %c0_12, %c8] : memref<19x8x12xf32, #tpu.memory_space<vmem>>, vector<16x8x4xf32>
    tpu.vector_store %arg9[%c3_11, %c0_12, %c8], %9 {strides = array<i32>} : memref<19x8x12xf32, #tpu.memory_space<vmem>>, vector<16x8x4xf32>,
    %12 = vector.extract_strided_slice %9 {offsets = [0, 0, 0], sizes = [16, 7, 4], strides = [1, 1, 1]} : vector<16x8x4xf32> to vector<16x7x4xf32>
    %c3_13 = arith.constant 3 : index
    %c1 = arith.constant 1 : index
    %c0_14 = arith.constant 0 : index
    %13 = vector.load %arg9[%c3_13, %c1, %c0_14] : memref<19x8x12xf32, #tpu.memory_space<vmem>>, vector<16x7x4xf32>
    tpu.vector_store %arg9[%c3_13, %c1, %c0_14], %12 {strides = array<i32>} : memref<19x8x12xf32, #tpu.memory_space<vmem>>, vector<16x7x4xf32>,
    %cst = arith.constant 0.000000e+00 : f32
    %14 = vector.broadcast %cst : f32 to vector<128x8xf32>
    %c0_15 = arith.constant 0 : index
    %c0_16 = arith.constant 0 : index
    %c0_17 = arith.constant 0 : index
    %15 = vector.load %arg9[%c0_15, %c0_16, %c0_17] : memref<19x8x12xf32, #tpu.memory_space<vmem>>, vector<16x8x12xf32>
    %16 = vector.shape_cast %15 : vector<16x8x12xf32> to vector<128x12xf32>
    %c0_18 = arith.constant 0 : index
    %c0_19 = arith.constant 0 : index
    %c0_20 = arith.constant 0 : index
    %17 = vector.load %arg4[%c0_18, %c0_19, %c0_20] : memref<4x12x8xf32, #tpu.memory_space<vmem>>, vector<1x12x8xf32>
    %18 = vector.shape_cast %17 : vector<1x12x8xf32> to vector<12x8xf32>
    %cst_21 = arith.constant dense<0.000000e+00> : vector<128x8xf32>
    %19 = tpu.matmul %16, %18, %cst_21 {dimension_numbers = #tpu.dot_dimension_numbers<[1], [0], [0], [1], [0, 0, 1, 1], [], []>} : vector<128x12xf32>, vector<12x8xf32>, vector<128x8xf32> -> vector<128x8xf32>
    %20 = arith.addf %14, %19 : vector<128x8xf32>
    %c1_22 = arith.constant 1 : index
    %c0_23 = arith.constant 0 : index
    %c0_24 = arith.constant 0 : index
    %21 = vector.load %arg9[%c1_22, %c0_23, %c0_24] : memref<19x8x12xf32, #tpu.memory_space<vmem>>, vector<16x8x12xf32>
    %22 = vector.shape_cast %21 : vector<16x8x12xf32> to vector<128x12xf32>
    %c1_25 = arith.constant 1 : index
    %c0_26 = arith.constant 0 : index
    %c0_27 = arith.constant 0 : index
    %23 = vector.load %arg4[%c1_25, %c0_26, %c0_27] : memref<4x12x8xf32, #tpu.memory_space<vmem>>, vector<1x12x8xf32>
    %24 = vector.shape_cast %23 : vector<1x12x8xf32> to vector<12x8xf32>
    %cst_28 = arith.constant dense<0.000000e+00> : vector<128x8xf32>
    %25 = tpu.matmul %22, %24, %cst_28 {dimension_numbers = #tpu.dot_dimension_numbers<[1], [0], [0], [1], [0, 0, 1, 1], [], []>} : vector<128x12xf32>, vector<12x8xf32>, vector<128x8xf32> -> vector<128x8xf32>
    %26 = arith.addf %20, %25 : vector<128x8xf32>
    %c2 = arith.constant 2 : index
    %c0_29 = arith.constant 0 : index
    %c0_30 = arith.constant 0 : index
    %27 = vector.load %arg9[%c2, %c0_29, %c0_30] : memref<19x8x12xf32, #tpu.memory_space<vmem>>, vector<16x8x12xf32>
    %28 = vector.shape_cast %27 : vector<16x8x12xf32> to vector<128x12xf32>
    %c2_31 = arith.constant 2 : index
    %c0_32 = arith.constant 0 : index
    %c0_33 = arith.constant 0 : index
    %29 = vector.load %arg4[%c2_31, %c0_32, %c0_33] : memref<4x12x8xf32, #tpu.memory_space<vmem>>, vector<1x12x8xf32>
    %30 = vector.shape_cast %29 : vector<1x12x8xf32> to vector<12x8xf32>
    %cst_34 = arith.constant dense<0.000000e+00> : vector<128x8xf32>
    %31 = tpu.matmul %28, %30, %cst_34 {dimension_numbers = #tpu.dot_dimension_numbers<[1], [0], [0], [1], [0, 0, 1, 1], [], []>} : vector<128x12xf32>, vector<12x8xf32>, vector<128x8xf32> -> vector<128x8xf32>
    %32 = arith.addf %26, %31 : vector<128x8xf32>
    %c3_35 = arith.constant 3 : index
    %c0_36 = arith.constant 0 : index
    %c0_37 = arith.constant 0 : index
    %33 = vector.load %arg9[%c3_35, %c0_36, %c0_37] : memref<19x8x12xf32, #tpu.memory_space<vmem>>, vector<16x8x12xf32>
    %34 = vector.shape_cast %33 : vector<16x8x12xf32> to vector<128x12xf32>
    %c3_38 = arith.constant 3 : index
    %c0_39 = arith.constant 0 : index
    %c0_40 = arith.constant 0 : index
    %35 = vector.load %arg4[%c3_38, %c0_39, %c0_40] : memref<4x12x8xf32, #tpu.memory_space<vmem>>, vector<1x12x8xf32>
    %36 = vector.shape_cast %35 : vector<1x12x8xf32> to vector<12x8xf32>
    %cst_41 = arith.constant dense<0.000000e+00> : vector<128x8xf32>
    %37 = tpu.matmul %34, %36, %cst_41 {dimension_numbers = #tpu.dot_dimension_numbers<[1], [0], [0], [1], [0, 0, 1, 1], [], []>} : vector<128x12xf32>, vector<12x8xf32>, vector<128x8xf32> -> vector<128x8xf32>
    %38 = arith.addf %32, %37 : vector<128x8xf32>
    %c0_42 = arith.constant 0 : index
    %c0_43 = arith.constant 0 : index
    %39 = vector.load %arg5[%c0_42, %c0_43] : memref<1x8xf32, #tpu.memory_space<vmem>>, vector<1x8xf32>
    %40 = vector.broadcast %39 : vector<1x8xf32> to vector<128x8xf32>
    %41 = arith.addf %38, %40 : vector<128x8xf32>
    %cst_44 = arith.constant 0.000000e+00 : f32
    %42 = vector.broadcast %cst_44 : f32 to vector<128x8xf32>
    %43 = arith.cmpf ogt, %41, %42 : vector<128x8xf32>
    %44 = math.exp %41 : vector<128x8xf32>
    %cst_45 = arith.constant 1.000000e+00 : f32
    %45 = vector.broadcast %cst_45 : f32 to vector<128x8xf32>
    %46 = arith.subf %44, %45 : vector<128x8xf32>
    %47 = arith.select %43, %41, %46 : vector<128x8xi1>, vector<128x8xf32>
    %48 = vector.shape_cast %47 : vector<128x8xf32> to vector<16x8x8xf32>
    %c3_46 = arith.constant 3 : index
    %c0_47 = arith.constant 0 : index
    %c8_48 = arith.constant 8 : index
    %49 = vector.load %arg10[%c3_46, %c0_47, %c8_48] : memref<19x8x24xf32, #tpu.memory_space<vmem>>, vector<16x8x8xf32>
    tpu.vector_store %arg10[%c3_46, %c0_47, %c8_48], %48 {strides = array<i32>} : memref<19x8x24xf32, #tpu.memory_space<vmem>>, vector<16x8x8xf32>,
    %50 = vector.extract_strided_slice %48 {offsets = [0, 0, 0], sizes = [16, 7, 8], strides = [1, 1, 1]} : vector<16x8x8xf32> to vector<16x7x8xf32>
    %c3_49 = arith.constant 3 : index
    %c1_50 = arith.constant 1 : index
    %c0_51 = arith.constant 0 : index
    %51 = vector.load %arg10[%c3_49, %c1_50, %c0_51] : memref<19x8x24xf32, #tpu.memory_space<vmem>>, vector<16x7x8xf32>
    tpu.vector_store %arg10[%c3_49, %c1_50, %c0_51], %50 {strides = array<i32>} : memref<19x8x24xf32, #tpu.memory_space<vmem>>, vector<16x7x8xf32>,
    %52 = vector.extract_strided_slice %48 {offsets = [0, 1, 0], sizes = [16, 7, 8], strides = [1, 1, 1]} : vector<16x8x8xf32> to vector<16x7x8xf32>
    %c3_52 = arith.constant 3 : index
    %c0_53 = arith.constant 0 : index
    %c16 = arith.constant 16 : index
    %53 = vector.load %arg10[%c3_52, %c0_53, %c16] : memref<19x8x24xf32, #tpu.memory_space<vmem>>, vector<16x7x8xf32>
    tpu.vector_store %arg10[%c3_52, %c0_53, %c16], %52 {strides = array<i32>} : memref<19x8x24xf32, #tpu.memory_space<vmem>>, vector<16x7x8xf32>,
    %cst_54 = arith.constant 0.000000e+00 : f32
    %54 = vector.broadcast %cst_54 : f32 to vector<128x8xf32>
    %c0_55 = arith.constant 0 : index
    %c0_56 = arith.constant 0 : index
    %c0_57 = arith.constant 0 : index
    %55 = vector.load %arg10[%c0_55, %c0_56, %c0_57] : memref<19x8x24xf32, #tpu.memory_space<vmem>>, vector<16x8x24xf32>
    %56 = vector.shape_cast %55 : vector<16x8x24xf32> to vector<128x24xf32>
    %c0_58 = arith.constant 0 : index
    %c0_59 = arith.constant 0 : index
    %c0_60 = arith.constant 0 : index
    %57 = vector.load %arg6[%c0_58, %c0_59, %c0_60] : memref<4x24x8xf32, #tpu.memory_space<vmem>>, vector<1x24x8xf32>
    %58 = vector.shape_cast %57 : vector<1x24x8xf32> to vector<24x8xf32>
    %cst_61 = arith.constant dense<0.000000e+00> : vector<128x8xf32>
    %59 = tpu.matmul %56, %58, %cst_61 {dimension_numbers = #tpu.dot_dimension_numbers<[1], [0], [0], [1], [0, 0, 1, 1], [], []>} : vector<128x24xf32>, vector<24x8xf32>, vector<128x8xf32> -> vector<128x8xf32>
    %60 = arith.addf %54, %59 : vector<128x8xf32>
    %c1_62 = arith.constant 1 : index
    %c0_63 = arith.constant 0 : index
    %c0_64 = arith.constant 0 : index
    %61 = vector.load %arg10[%c1_62, %c0_63, %c0_64] : memref<19x8x24xf32, #tpu.memory_space<vmem>>, vector<16x8x24xf32>
    %62 = vector.shape_cast %61 : vector<16x8x24xf32> to vector<128x24xf32>
    %c1_65 = arith.constant 1 : index
    %c0_66 = arith.constant 0 : index
    %c0_67 = arith.constant 0 : index
    %63 = vector.load %arg6[%c1_65, %c0_66, %c0_67] : memref<4x24x8xf32, #tpu.memory_space<vmem>>, vector<1x24x8xf32>
    %64 = vector.shape_cast %63 : vector<1x24x8xf32> to vector<24x8xf32>
    %cst_68 = arith.constant dense<0.000000e+00> : vector<128x8xf32>
    %65 = tpu.matmul %62, %64, %cst_68 {dimension_numbers = #tpu.dot_dimension_numbers<[1], [0], [0], [1], [0, 0, 1, 1], [], []>} : vector<128x24xf32>, vector<24x8xf32>, vector<128x8xf32> -> vector<128x8xf32>
    %66 = arith.addf %60, %65 : vector<128x8xf32>
    %c2_69 = arith.constant 2 : index
    %c0_70 = arith.constant 0 : index
    %c0_71 = arith.constant 0 : index
    %67 = vector.load %arg10[%c2_69, %c0_70, %c0_71] : memref<19x8x24xf32, #tpu.memory_space<vmem>>, vector<16x8x24xf32>
    %68 = vector.shape_cast %67 : vector<16x8x24xf32> to vector<128x24xf32>
    %c2_72 = arith.constant 2 : index
    %c0_73 = arith.constant 0 : index
    %c0_74 = arith.constant 0 : index
    %69 = vector.load %arg6[%c2_72, %c0_73, %c0_74] : memref<4x24x8xf32, #tpu.memory_space<vmem>>, vector<1x24x8xf32>
    %70 = vector.shape_cast %69 : vector<1x24x8xf32> to vector<24x8xf32>
    %cst_75 = arith.constant dense<0.000000e+00> : vector<128x8xf32>
    %71 = tpu.matmul %68, %70, %cst_75 {dimension_numbers = #tpu.dot_dimension_numbers<[1], [0], [0], [1], [0, 0, 1, 1], [], []>} : vector<128x24xf32>, vector<24x8xf32>, vector<128x8xf32> -> vector<128x8xf32>
    %72 = arith.addf %66, %71 : vector<128x8xf32>
    %c3_76 = arith.constant 3 : index
    %c0_77 = arith.constant 0 : index
    %c0_78 = arith.constant 0 : index
    %73 = vector.load %arg10[%c3_76, %c0_77, %c0_78] : memref<19x8x24xf32, #tpu.memory_space<vmem>>, vector<16x8x24xf32>
    %74 = vector.shape_cast %73 : vector<16x8x24xf32> to vector<128x24xf32>
    %c3_79 = arith.constant 3 : index
    %c0_80 = arith.constant 0 : index
    %c0_81 = arith.constant 0 : index
    %75 = vector.load %arg6[%c3_79, %c0_80, %c0_81] : memref<4x24x8xf32, #tpu.memory_space<vmem>>, vector<1x24x8xf32>
    %76 = vector.shape_cast %75 : vector<1x24x8xf32> to vector<24x8xf32>
    %cst_82 = arith.constant dense<0.000000e+00> : vector<128x8xf32>
    %77 = tpu.matmul %74, %76, %cst_82 {dimension_numbers = #tpu.dot_dimension_numbers<[1], [0], [0], [1], [0, 0, 1, 1], [], []>} : vector<128x24xf32>, vector<24x8xf32>, vector<128x8xf32> -> vector<128x8xf32>
    %78 = arith.addf %72, %77 : vector<128x8xf32>
    %c0_83 = arith.constant 0 : index
    %c0_84 = arith.constant 0 : index
    %79 = vector.load %arg7[%c0_83, %c0_84] : memref<1x8xf32, #tpu.memory_space<vmem>>, vector<1x8xf32>
    %80 = vector.broadcast %79 : vector<1x8xf32> to vector<128x8xf32>
    %81 = arith.addf %78, %80 : vector<128x8xf32>
    %cst_85 = arith.constant 0.000000e+00 : f32
    %82 = vector.broadcast %cst_85 : f32 to vector<128x8xf32>
    %83 = arith.cmpf ogt, %81, %82 : vector<128x8xf32>
    %84 = math.exp %81 : vector<128x8xf32>
    %cst_86 = arith.constant 1.000000e+00 : f32
    %85 = vector.broadcast %cst_86 : f32 to vector<128x8xf32>
    %86 = arith.subf %84, %85 : vector<128x8xf32>
    %87 = arith.select %83, %81, %86 : vector<128x8xi1>, vector<128x8xf32>
    %88 = arith.addf %87, %47 : vector<128x8xf32>
    %89 = tpu.transpose %88, [1, 0] : vector<128x8xf32> -> vector<8x128xf32>
    %c0_87 = arith.constant 0 : index
    %c0_88 = arith.constant 0 : index
    %c0_89 = arith.constant 0 : index
    %90 = vector.load %arg8[%c0_87, %c0_88, %c0_89] : memref<1x8x128xf32, #tpu.memory_space<vmem>>, vector<1x8x128xf32>
    %91 = vector.shape_cast %90 : vector<1x8x128xf32> to vector<8x128xf32>
    %92 = vector.shape_cast %89 : vector<8x128xf32> to vector<1x8x128xf32>
    tpu.vector_store %arg8[%c0_87, %c0_88, %c0_89], %92 {strides = array<i32>} : memref<1x8x128xf32, #tpu.memory_space<vmem>>, vector<1x8x128xf32>,
    return
  }
  func.func @transform_0(%arg0: i32, %arg1: i32) -> (i32, i32, i32, i32) {
    %c0_i32 = arith.constant 0 : i32
    %c0_i32_0 = arith.constant 0 : i32
    %c0_i32_1 = arith.constant 0 : i32
    return %arg0, %arg1, %c0_i32, %c0_i32_0 : i32, i32, i32, i32
  }
  func.func @transform_1(%arg0: i32, %arg1: i32) -> (i32, i32, i32, i32) {
    %c0_i32 = arith.constant 0 : i32
    %c0_i32_0 = arith.constant 0 : i32
    %c0_i32_1 = arith.constant 0 : i32
    return %arg0, %arg1, %c0_i32, %c0_i32_0 : i32, i32, i32, i32
  }
  func.func @transform_2(%arg0: i32, %arg1: i32) -> (i32, i32, i32) {
    %c0_i32 = arith.constant 0 : i32
    %c0_i32_0 = arith.constant 0 : i32
    %c0_i32_1 = arith.constant 0 : i32
    %c0_i32_2 = arith.constant 0 : i32
    return %c0_i32, %c0_i32_0, %c0_i32_1 : i32, i32, i32
  }
  func.func @transform_3(%arg0: i32, %arg1: i32) -> (i32, i32) {
    %c0_i32 = arith.constant 0 : i32
    %c0_i32_0 = arith.constant 0 : i32
    %c0_i32_1 = arith.constant 0 : i32
    return %c0_i32, %c0_i32_0 : i32, i32
  }
  func.func @transform_4(%arg0: i32, %arg1: i32) -> (i32, i32, i32) {
    %c0_i32 = arith.constant 0 : i32
    %c0_i32_0 = arith.constant 0 : i32
    %c0_i32_1 = arith.constant 0 : i32
    %c0_i32_2 = arith.constant 0 : i32
    return %c0_i32, %c0_i32_0, %c0_i32_1 : i32, i32, i32
  }
  func.func @transform_5(%arg0: i32, %arg1: i32) -> (i32, i32) {
    %c0_i32 = arith.constant 0 : i32
    %c0_i32_0 = arith.constant 0 : i32
    %c0_i32_1 = arith.constant 0 : i32
    return %c0_i32, %c0_i32_0 : i32, i32
  }
  func.func @transform_6(%arg0: i32, %arg1: i32) -> (i32, i32, i32) {
    %c0_i32 = arith.constant 0 : i32
    %c0_i32_0 = arith.constant 0 : i32
    return %arg0, %c0_i32, %arg1 : i32, i32, i32
  }
}

</mosaic_0001>

<llo_original>
// kernel: encoder_block.1
$region0: #{encoder_block.1}
  #allocation0 [shape = 'u32[]', space=smem, size = 0x4, offset = 0x4, fixed_abs, tag = 'smem constant byte address 0x4 - core index']
  #allocation1 [shape = 'u32[144,128]{1,0:T(1,128)}', space=vmem, size = 0x12000, scoped, tag = 'internal scratch']
  #allocation2 [shape = 'f32[19,8,12]{2,1,0:T(8,128)}', space=vmem, size = 0x13000, scoped, tag = 'scratch operand']
  #allocation3 [shape = 'f32[19,8,24]{2,1,0:T(8,128)}', space=vmem, size = 0x13000, scoped, tag = 'scratch operand']
  %s0 = inlined_call_operand.vmem [shape: f32[2,32,8,4], index: 0, kind: input, shape index: {}]
  %s1 = inlined_call_operand.vmem [shape: f32[2,32,8,4], index: 1, kind: input, shape index: {}]
  %s2 = inlined_call_operand.vmem [shape: f32[4,12,8], index: 2, kind: input, shape index: {}]
  %s3 = inlined_call_operand.vmem [shape: f32[1,8], index: 3, kind: input, shape index: {}]
  %s4 = inlined_call_operand.vmem [shape: f32[4,24,8], index: 4, kind: input, shape index: {}]
  %s5 = inlined_call_operand.vmem [shape: f32[1,8], index: 5, kind: input, shape index: {}]
  %s6 = inlined_call_operand.vmem [shape: f32[2,8,256], index: 6, kind: output, shape index: {}]
  %s7 = sld [smem:[#allocation0]]
  $region65: #{encoder_block.1} parent=0
    _
  %s9 = ssub.s32 1, %s7
  %s10 = scalar_select 0, %s9, %s7
  loop: start=0, step=1, limit=6
  $region2: #{encoder_block.1} parent=0 // loop_pre_header
    _
  $region3: #{encoder_block.1} parent=0 // loop_header
    %s12 = sphi 0, %s16
    %p13 = scmp.ge.s32.totalorder %s12, 6
    %s19 = sphi 0, %s31
    %s20 = sphi 0, %s27
    %s21 = sphi 0, %s19
    %s22 = sphi 0, %s20
    %s23 = sphi 0, %s21
    %s24 = sphi 0, %s22
    %s36 = sphi 0, %s38
    %s39 = sphi 0, %s36
    %s40 = sphi 0, %s39
    %s56 = sphi 0, %s40
    %s64 = sphi 0, %s66
    %s67 = sphi 0, %s64
    %s68 = sphi 0, %s67
    %s84 = sphi 0, %s68
    %s88 = sphi 0, %s88
    %s90 = sphi 0, %s88
    %s91 = sphi 0, %s90
    %s105 = sphi 0, %s91
    %s109 = sphi 0, %s109
    %s111 = sphi 0, %s109
    %s112 = sphi 0, %s111
    %s126 = sphi 0, %s112
    %s130 = sphi 0, %s130
    %s132 = sphi 0, %s130
    %s133 = sphi 0, %s132
    %s147 = sphi 0, %s133
    %s151 = sphi 0, %s151
    %s153 = sphi 0, %s151
    %s154 = sphi 0, %s153
    %s168 = sphi 0, %s154
    %s176 = sphi 0, %s178
    %s179 = sphi 0, %s176
    %s180 = sphi 0, %s179
    %s196 = sphi 0, %s180
  $region4: #{encoder_block.1} parent=0 // loop_header_branch
    %15 = sbr.rel (%p13) target = $region8
  $region5: #{encoder_block.1} parent=0 // loop_body
    %s17 = ssub.s32 %s12, 1
    %s18 = ssub.s32 %s12, 2
    %s25 = sadd.s32 1, %s20
    %p26 = scmp.ge.s32.totalorder %s25, 2
    %s27 = scalar_select %p26, 0, %s25
    %s28 = sadd.s32 1, %s19
    %s29 = scalar_select %p26, %s28, %s19
    %p30 = scmp.ge.s32.totalorder %s29, 2
    %s31 = scalar_select %p30, 0, %s29
    %s32 = ssub.s32 %s19, %s31
    %s33 = ssub.s32 %s20, %s27
    %s34 = sor.u32 %s32, %s33
    %p35 = scmp.eq.s32.totalorder %s34, 0
    %s37 = sadd.s32 %s36, 1
    %s38 = scalar_select %p35, %s36, %s37
    %p41 = pneg %p35
    %p42 = scmp.eq.s32.totalorder %s12, 3
    %p43 = por %p41, %p42
    %p44 = scmp.ne.s32.totalorder %s36, %s39
    %p45 = scmp.eq.s32.totalorder %s12, 0
    %p46 = por %p44, %p45
    %p47 = scmp.ne.s32.totalorder %s36, %s39
    %p48 = scmp.eq.s32.totalorder %s17, 3
    %p49 = por %p47, %p48
    %p50 = scmp.ne.s32.totalorder %s39, %s40
    %p51 = scmp.eq.s32.totalorder %s17, 0
    %p52 = por %p50, %p51
    %p53 = scmp.ne.s32.totalorder %s39, %s40
    %p54 = scmp.eq.s32.totalorder %s18, 3
    %p55 = por %p53, %p54
    %p57 = scmp.ne.s32.totalorder %s40, %s56
    %p58 = scmp.eq.s32.totalorder %s18, 0
    %p59 = por %p57, %p58
    %s60 = ssub.s32 %s19, %s31
    %s61 = ssub.s32 %s20, %s27
    %s62 = sor.u32 %s60, %s61
    %p63 = scmp.eq.s32.totalorder %s62, 0
    %s65 = sadd.s32 %s64, 1
    %s66 = scalar_select %p63, %s64, %s65
    %p69 = pneg %p63
    %p70 = scmp.eq.s32.totalorder %s12, 3
    %p71 = por %p69, %p70
    %p72 = scmp.ne.s32.totalorder %s64, %s67
    %p73 = scmp.eq.s32.totalorder %s12, 0
    %p74 = por %p72, %p73
    %p75 = scmp.ne.s32.totalorder %s64, %s67
    %p76 = scmp.eq.s32.totalorder %s17, 3
    %p77 = por %p75, %p76
    %p78 = scmp.ne.s32.totalorder %s67, %s68
    %p79 = scmp.eq.s32.totalorder %s17, 0
    %p80 = por %p78, %p79
    %p81 = scmp.ne.s32.totalorder %s67, %s68
    %p82 = scmp.eq.s32.totalorder %s18, 3
    %p83 = por %p81, %p82
    %p85 = scmp.ne.s32.totalorder %s68, %s84
    %p86 = scmp.eq.s32.totalorder %s18, 0
    %p87 = por %p85, %p86
    %s89 = sadd.s32 %s88, 1
    %p92 = scmp.eq.s32.totalorder %s12, 3
    %p93 = scmp.ne.s32.totalorder %s88, %s90
    %p94 = scmp.eq.s32.totalorder %s12, 0
    %p95 = por %p93, %p94
    %p96 = scmp.ne.s32.totalorder %s88, %s90
    %p97 = scmp.eq.s32.totalorder %s17, 3
    %p98 = por %p96, %p97
    %p99 = scmp.ne.s32.totalorder %s90, %s91
    %p100 = scmp.eq.s32.totalorder %s17, 0
    %p101 = por %p99, %p100
    %p102 = scmp.ne.s32.totalorder %s90, %s91
    %p103 = scmp.eq.s32.totalorder %s18, 3
    %p104 = por %p102, %p103
    %p106 = scmp.ne.s32.totalorder %s91, %s105
    %p107 = scmp.eq.s32.totalorder %s18, 0
    %p108 = por %p106, %p107
    %s110 = sadd.s32 %s109, 1
    %p113 = scmp.eq.s32.totalorder %s12, 3
    %p114 = scmp.ne.s32.totalorder %s109, %s111
    %p115 = scmp.eq.s32.totalorder %s12, 0
    %p116 = por %p114, %p115
    %p117 = scmp.ne.s32.totalorder %s109, %s111
    %p118 = scmp.eq.s32.totalorder %s17, 3
    %p119 = por %p117, %p118
    %p120 = scmp.ne.s32.totalorder %s111, %s112
    %p121 = scmp.eq.s32.totalorder %s17, 0
    %p122 = por %p120, %p121
    %p123 = scmp.ne.s32.totalorder %s111, %s112
    %p124 = scmp.eq.s32.totalorder %s18, 3
    %p125 = por %p123, %p124
    %p127 = scmp.ne.s32.totalorder %s112, %s126
    %p128 = scmp.eq.s32.totalorder %s18, 0
    %p129 = por %p127, %p128
    %s131 = sadd.s32 %s130, 1
    %p134 = scmp.eq.s32.totalorder %s12, 3
    %p135 = scmp.ne.s32.totalorder %s130, %s132
    %p136 = scmp.eq.s32.totalorder %s12, 0
    %p137 = por %p135, %p136
    %p138 = scmp.ne.s32.totalorder %s130, %s132
    %p139 = scmp.eq.s32.totalorder %s17, 3
    %p140 = por %p138, %p139
    %p141 = scmp.ne.s32.totalorder %s132, %s133
    %p142 = scmp.eq.s32.totalorder %s17, 0
    %p143 = por %p141, %p142
    %p144 = scmp.ne.s32.totalorder %s132, %s133
    %p145 = scmp.eq.s32.totalorder %s18, 3
    %p146 = por %p144, %p145
    %p148 = scmp.ne.s32.totalorder %s133, %s147
    %p149 = scmp.eq.s32.totalorder %s18, 0
    %p150 = por %p148, %p149
    %s152 = sadd.s32 %s151, 1
    %p155 = scmp.eq.s32.totalorder %s12, 3
    %p156 = scmp.ne.s32.totalorder %s151, %s153
    %p157 = scmp.eq.s32.totalorder %s12, 0
    %p158 = por %p156, %p157
    %p159 = scmp.ne.s32.totalorder %s151, %s153
    %p160 = scmp.eq.s32.totalorder %s17, 3
    %p161 = por %p159, %p160
    %p162 = scmp.ne.s32.totalorder %s153, %s154
    %p163 = scmp.eq.s32.totalorder %s17, 0
    %p164 = por %p162, %p163
    %p165 = scmp.ne.s32.totalorder %s153, %s154
    %p166 = scmp.eq.s32.totalorder %s18, 3
    %p167 = por %p165, %p166
    %p169 = scmp.ne.s32.totalorder %s154, %s168
    %p170 = scmp.eq.s32.totalorder %s18, 0
    %p171 = por %p169, %p170
    %s172 = ssub.s32 %s19, %s31
    %s173 = ssub.s32 %s20, %s27
    %s174 = sor.u32 %s172, %s173
    %p175 = scmp.eq.s32.totalorder %s174, 0
    %s177 = sadd.s32 %s176, 1
    %s178 = scalar_select %p175, %s176, %s177
    %p181 = pneg %p175
    %p182 = scmp.eq.s32.totalorder %s12, 3
    %p183 = por %p181, %p182
    %p184 = scmp.ne.s32.totalorder %s176, %s179
    %p185 = scmp.eq.s32.totalorder %s12, 0
    %p186 = por %p184, %p185
    %p187 = scmp.ne.s32.totalorder %s176, %s179
    %p188 = scmp.eq.s32.totalorder %s17, 3
    %p189 = por %p187, %p188
    %p190 = scmp.ne.s32.totalorder %s179, %s180
    %p191 = scmp.eq.s32.totalorder %s17, 0
    %p192 = por %p190, %p191
    %p193 = scmp.ne.s32.totalorder %s179, %s180
    %p194 = scmp.eq.s32.totalorder %s18, 3
    %p195 = por %p193, %p194
    %p197 = scmp.ne.s32.totalorder %s180, %s196
    %p198 = scmp.eq.s32.totalorder %s18, 0
    %p199 = por %p197, %p198
    %p200 = scmp.le.s32.totalorder 1, %s12
    %p201 = scmp.lt.s32.totalorder %s12, 5
    %p202 = pnand %p200, %p201
    %p203 = pneg %p202
    // Predicated region
    $region9: #{encoder_block.1} parent=5 // pred_check
      _
    $region10: #{encoder_block.1} parent=5 // pred_check_branch
      %205 = sbr.rel (%p202) target = $region12
    $region11: #{encoder_block.1} parent=5 // pred_region
      %s206 = ssub.s32 %s12, 1
      // Predicated region
      $region13: #{encoder_block.1} parent=11 // pred_check
        %p207 = pneg %p101
      $region14: #{encoder_block.1} parent=11 // pred_check_branch
        %209 = sbr.rel (%p207) target = $region16
      $region15: #{encoder_block.1} parent=11 // pred_region
        _
      $region16: #{encoder_block.1} parent=11 // pred_fallthru
        _
      // Predicated region
      $region17: #{encoder_block.1} parent=11 // pred_check
        %p210 = pneg %p122
      $region18: #{encoder_block.1} parent=11 // pred_check_branch
        %212 = sbr.rel (%p210) target = $region20
      $region19: #{encoder_block.1} parent=11 // pred_region
        _
      $region20: #{encoder_block.1} parent=11 // pred_fallthru
        _
      // Predicated region
      $region21: #{encoder_block.1} parent=11 // pred_check
        %p213 = pneg %p143
      $region22: #{encoder_block.1} parent=11 // pred_check_branch
        %215 = sbr.rel (%p213) target = $region24
      $region23: #{encoder_block.1} parent=11 // pred_region
        _
      $region24: #{encoder_block.1} parent=11 // pred_fallthru
        _
      // Predicated region
      $region25: #{encoder_block.1} parent=11 // pred_check
        %p216 = pneg %p164
      $region26: #{encoder_block.1} parent=11 // pred_check_branch
        %218 = sbr.rel (%p216) target = $region28
      $region27: #{encoder_block.1} parent=11 // pred_region
        _
      $region28: #{encoder_block.1} parent=11 // pred_fallthru
        _
    $region12: #{encoder_block.1} parent=5 // pred_fallthru
      _
    %p219 = scmp.lt.s32.totalorder %s12, 4
    // Predicated region
    $region29: #{encoder_block.1} parent=5 // pred_check
      %p220 = pneg %p219
    $region30: #{encoder_block.1} parent=5 // pred_check_branch
      %222 = sbr.rel (%p220) target = $region32
    $region31: #{encoder_block.1} parent=5 // pred_region
      // Predicated region
      $region33: #{encoder_block.1} parent=31 // pred_check
        %p223 = pneg %p46
      $region34: #{encoder_block.1} parent=31 // pred_check_branch
        %225 = sbr.rel (%p223) target = $region36
      $region35: #{encoder_block.1} parent=31 // pred_region
        %s226 = smul.u32 16, %s20
        %p227 = scmp.lt.s32.totalorder %s19, 1
        %s228 = scalar_select %p227, %s19, 1
        %p229 = scmp.lt.s32.totalorder %s226, 31
        %s230 = scalar_select %p229, %s226, 31
        %s231 = smul.addr %s228, 32
        %s232 = sadd.s32 %s230, %s231
        %s233 = smul.addr %s232, 8
        %s234 = scalar_lea.vmem %s0, %s233
        %s235 = smul.u32 16, %s20
      $region36: #{encoder_block.1} parent=31 // pred_fallthru
        _
      // Predicated region
      $region37: #{encoder_block.1} parent=31 // pred_check
        %p236 = pneg %p74
      $region38: #{encoder_block.1} parent=31 // pred_check_branch
        %238 = sbr.rel (%p236) target = $region40
      $region39: #{encoder_block.1} parent=31 // pred_region
        %s239 = smul.u32 16, %s20
        %p240 = scmp.lt.s32.totalorder %s19, 1
        %s241 = scalar_select %p240, %s19, 1
        %p242 = scmp.lt.s32.totalorder %s239, 31
        %s243 = scalar_select %p242, %s239, 31
        %s244 = smul.addr %s241, 32
        %s245 = sadd.s32 %s243, %s244
        %s246 = smul.addr %s245, 8
        %s247 = scalar_lea.vmem %s1, %s246
        %s248 = smul.u32 16, %s20
      $region40: #{encoder_block.1} parent=31 // pred_fallthru
        _
    $region32: #{encoder_block.1} parent=5 // pred_fallthru
      _
    %p249 = scmp.le.s32.totalorder 1, %s12
    %p250 = scmp.lt.s32.totalorder %s12, 5
    %p251 = pnand %p249, %p250
    %p252 = pneg %p251
    // Predicated region
    $region41: #{encoder_block.1} parent=5 // pred_check
      _
    $region42: #{encoder_block.1} parent=5 // pred_check_branch
      %254 = sbr.rel (%p251) target = $region44
    $region43: #{encoder_block.1} parent=5 // pred_region
      %s255 = ssub.s32 %s12, 1
      %s256 = smul.u32 16, %s22
      %p257 = scmp.lt.s32.totalorder %s21, 1
      %s258 = scalar_select %p257, %s21, 1
      %p259 = scmp.lt.s32.totalorder %s256, 31
      %s260 = scalar_select %p259, %s256, 31
      %s261 = smul.addr %s258, 32
      %s262 = sadd.s32 %s260, %s261
      %s263 = smul.addr %s262, 8
      %s264 = scalar_lea.vmem %s0, %s263
      %p265 = pneg %p52
      %p266 = pneg %p49
      %s267 = smul.u32 16, %s22
      %p268 = scmp.lt.s32.totalorder %s21, 1
      %s269 = scalar_select %p268, %s21, 1
      %p270 = scmp.lt.s32.totalorder %s267, 31
      %s271 = scalar_select %p270, %s267, 31
      %s272 = smul.addr %s269, 32
      %s273 = sadd.s32 %s271, %s272
      %s274 = smul.addr %s273, 8
      %s275 = scalar_lea.vmem %s1, %s274
      %p276 = pneg %p80
      %p277 = pneg %p77
      %p278 = pneg %p101
      %p279 = pneg %p98
      %p280 = pneg %p122
      %p281 = pneg %p119
      %p282 = pneg %p143
      %p283 = pneg %p140
      %p284 = pneg %p164
      %p285 = pneg %p161
      %p286 = pneg %p192
      %p287 = pneg %p189
      %p288 = scmp.lt.s32.totalorder %s21, 1
      %s289 = scalar_select %p288, %s21, 1
      %p290 = scmp.lt.s32.totalorder %s22, 1
      %s291 = scalar_select %p290, %s22, 1
      %s292 = smul.addr %s289, 2
      %s293 = sadd.s32 %s291, %s292
      %s294 = smul.addr %s293, 8
      %s295 = scalar_lea.vmem %s6, %s294
      %s296 = smul.u32 16, %s22
      %p297 = scmp.lt.s32.totalorder %s21, 1
      %s298 = scalar_select %p297, %s21, 1
      %p299 = scmp.lt.s32.totalorder %s296, 31
      %s300 = scalar_select %p299, %s296, 31
      %s301 = smul.addr %s298, 32
      %s302 = sadd.s32 %s300, %s301
      %s303 = smul.addr %s302, 8
      %s304 = scalar_lea.vmem %s0, %s303
      %s305 = smul.u32 16, %s22
      %s306 = smul.u32 16, %s22
      %p307 = scmp.lt.s32.totalorder %s21, 1
      %s308 = scalar_select %p307, %s21, 1
      %p309 = scmp.lt.s32.totalorder %s306, 31
      %s310 = scalar_select %p309, %s306, 31
      %s311 = smul.addr %s308, 32
      %s312 = sadd.s32 %s310, %s311
      %s313 = smul.addr %s312, 8
      %s314 = scalar_lea.vmem %s1, %s313
      %s315 = smul.u32 16, %s22
      %p316 = scmp.lt.s32.totalorder %s21, 1
      %s317 = scalar_select %p316, %s21, 1
      %p318 = scmp.lt.s32.totalorder %s22, 1
      %s319 = scalar_select %p318, %s22, 1
      %s320 = smul.addr %s317, 2
      %s321 = sadd.s32 %s319, %s320
      %s322 = smul.addr %s321, 8
      %s323 = scalar_lea.vmem %s6, %s322
      %p324 = scmp.eq.s32.totalorder %s22, 0
      // Predicated region
      $region45: #{encoder_block.1} parent=43 // pred_check
        %p325 = pneg %p324
      $region46: #{encoder_block.1} parent=43 // pred_check_branch
        %327 = sbr.rel (%p325) target = $region48
      $region47: #{encoder_block.1} parent=43 // pred_region
        %vm328 = vcmask 97280
        %329 = vst.msk [vmem:[#allocation2] sm:$0xff] %vm328, 0.0
        %330 = vst.msk [vmem:[#allocation2 + $0x8] sm:$0xff] %vm328, 0.0
        %331 = vst.msk [vmem:[#allocation2 + $0x10] sm:$0xff] %vm328, 0.0
        %vm332 = vcmask 195584
        %333 = vst.msk [vmem:[#allocation3] sm:$0xff] %vm332, 0.0
        %334 = vst.msk [vmem:[#allocation3 + $0x8] sm:$0xff] %vm332, 0.0
        %335 = vst.msk [vmem:[#allocation3 + $0x10] sm:$0xff] %vm332, 0.0
        %s336 = scalar_lea.vmem [#allocation2], 24
        %vm337 = vcmask 24576
        %338 = vst.msk [vmem:[%s336] sm:$0x1] %vm337, 0.0
        %339 = vst.msk [vmem:[%s336 + $0x8] sm:$0x1] %vm337, 0.0
        %340 = vst.msk [vmem:[%s336 + $0x10] sm:$0x1] %vm337, 0.0
        %341 = vst.msk [vmem:[%s336 + $0x18] sm:$0x1] %vm337, 0.0
        %342 = vst.msk [vmem:[%s336 + $0x20] sm:$0x1] %vm337, 0.0
        %343 = vst.msk [vmem:[%s336 + $0x28] sm:$0x1] %vm337, 0.0
        %344 = vst.msk [vmem:[%s336 + $0x30] sm:$0x1] %vm337, 0.0
        %345 = vst.msk [vmem:[%s336 + $0x38] sm:$0x1] %vm337, 0.0
        %346 = vst.msk [vmem:[%s336 + $0x40] sm:$0x1] %vm337, 0.0
        %347 = vst.msk [vmem:[%s336 + $0x48] sm:$0x1] %vm337, 0.0
        %348 = vst.msk [vmem:[%s336 + $0x50] sm:$0x1] %vm337, 0.0
        %349 = vst.msk [vmem:[%s336 + $0x58] sm:$0x1] %vm337, 0.0
        %350 = vst.msk [vmem:[%s336 + $0x60] sm:$0x1] %vm337, 0.0
        %351 = vst.msk [vmem:[%s336 + $0x68] sm:$0x1] %vm337, 0.0
        %352 = vst.msk [vmem:[%s336 + $0x70] sm:$0x1] %vm337, 0.0
        %353 = vst.msk [vmem:[%s336 + $0x78] sm:$0x1] %vm337, 0.0
        %s354 = scalar_lea.vmem [#allocation3], 24
        %vm355 = vcmask 57344
        %356 = vst.msk [vmem:[%s354] sm:$0x1] %vm355, 0.0
        %357 = vst.msk [vmem:[%s354 + $0x8] sm:$0x1] %vm355, 0.0
        %358 = vst.msk [vmem:[%s354 + $0x10] sm:$0x1] %vm355, 0.0
        %359 = vst.msk [vmem:[%s354 + $0x18] sm:$0x1] %vm355, 0.0
        %360 = vst.msk [vmem:[%s354 + $0x20] sm:$0x1] %vm355, 0.0
        %361 = vst.msk [vmem:[%s354 + $0x28] sm:$0x1] %vm355, 0.0
        %362 = vst.msk [vmem:[%s354 + $0x30] sm:$0x1] %vm355, 0.0
        %363 = vst.msk [vmem:[%s354 + $0x38] sm:$0x1] %vm355, 0.0
        %364 = vst.msk [vmem:[%s354 + $0x40] sm:$0x1] %vm355, 0.0
        %365 = vst.msk [vmem:[%s354 + $0x48] sm:$0x1] %vm355, 0.0
        %366 = vst.msk [vmem:[%s354 + $0x50] sm:$0x1] %vm355, 0.0
        %367 = vst.msk [vmem:[%s354 + $0x58] sm:$0x1] %vm355, 0.0
        %368 = vst.msk [vmem:[%s354 + $0x60] sm:$0x1] %vm355, 0.0
        %369 = vst.msk [vmem:[%s354 + $0x68] sm:$0x1] %vm355, 0.0
        %370 = vst.msk [vmem:[%s354 + $0x70] sm:$0x1] %vm355, 0.0
        %371 = vst.msk [vmem:[%s354 + $0x78] sm:$0x1] %vm355, 0.0
        %vm372 = vcmask 188544
        %373 = vst.msk [vmem:[%s354 + $0x7] sm:$0x1] %vm372, 0.0
        %374 = vst.msk [vmem:[%s354 + $0xf] sm:$0x1] %vm372, 0.0
        %375 = vst.msk [vmem:[%s354 + $0x17] sm:$0x1] %vm372, 0.0
        %376 = vst.msk [vmem:[%s354 + $0x1f] sm:$0x1] %vm372, 0.0
        %377 = vst.msk [vmem:[%s354 + $0x27] sm:$0x1] %vm372, 0.0
        %378 = vst.msk [vmem:[%s354 + $0x2f] sm:$0x1] %vm372, 0.0
        %379 = vst.msk [vmem:[%s354 + $0x37] sm:$0x1] %vm372, 0.0
        %380 = vst.msk [vmem:[%s354 + $0x3f] sm:$0x1] %vm372, 0.0
        %381 = vst.msk [vmem:[%s354 + $0x47] sm:$0x1] %vm372, 0.0
        %382 = vst.msk [vmem:[%s354 + $0x4f] sm:$0x1] %vm372, 0.0
        %383 = vst.msk [vmem:[%s354 + $0x57] sm:$0x1] %vm372, 0.0
        %384 = vst.msk [vmem:[%s354 + $0x5f] sm:$0x1] %vm372, 0.0
        %385 = vst.msk [vmem:[%s354 + $0x67] sm:$0x1] %vm372, 0.0
        %386 = vst.msk [vmem:[%s354 + $0x6f] sm:$0x1] %vm372, 0.0
        %387 = vst.msk [vmem:[%s354 + $0x77] sm:$0x1] %vm372, 0.0
        %388 = vst.msk [vmem:[%s354 + $0x7f] sm:$0x1] %vm372, 0.0
      $region48: #{encoder_block.1} parent=43 // pred_fallthru
        _
      %p389 = scmp.gt.s32.totalorder %s22, 0
      // Predicated region
      $region49: #{encoder_block.1} parent=43 // pred_check
        %p390 = pneg %p389
      $region50: #{encoder_block.1} parent=43 // pred_check_branch
        %392 = sbr.rel (%p390) target = $region52
      $region51: #{encoder_block.1} parent=43 // pred_region
        %s393 = scalar_lea.vmem [#allocation2], 128
        %v394 = vld [vmem:[%s393] sm:$0xff]
        %v395 = vld [vmem:[%s393 + $0x8] sm:$0xff]
        %v396 = vld [vmem:[%s393 + $0x10] sm:$0xff]
        %vm397 = vcmask 97280
        %398 = vst.msk [vmem:[#allocation2] sm:$0xff] %vm397, %v394
        %399 = vst.msk [vmem:[#allocation2 + $0x8] sm:$0xff] %vm397, %v395
        %400 = vst.msk [vmem:[#allocation2 + $0x10] sm:$0xff] %vm397, %v396
        %s401 = scalar_lea.vmem [#allocation3], 128
        %v402 = vld [vmem:[%s401] sm:$0xff]
        %v403 = vld [vmem:[%s401 + $0x8] sm:$0xff]
        %v404 = vld [vmem:[%s401 + $0x10] sm:$0xff]
        %vm405 = vcmask 195584
        %406 = vst.msk [vmem:[#allocation3] sm:$0xff] %vm405, %v402
        %407 = vst.msk [vmem:[#allocation3 + $0x8] sm:$0xff] %vm405, %v403
        %408 = vst.msk [vmem:[#allocation3 + $0x10] sm:$0xff] %vm405, %v404
      $region52: #{encoder_block.1} parent=43 // pred_fallthru
        _
      %v409 = vld [vmem:[%s304] sm:$0xff]
      %v410 = vld [vmem:[%s304 + $0x8] sm:$0xff]
      %v411 = vld [vmem:[%s304 + $0x10] sm:$0xff]
      %v412 = vld [vmem:[%s304 + $0x18] sm:$0xff]
      %v413 = vld [vmem:[%s304 + $0x20] sm:$0xff]
      %v414 = vld [vmem:[%s304 + $0x28] sm:$0xff]
      %v415 = vld [vmem:[%s304 + $0x30] sm:$0xff]
      %v416 = vld [vmem:[%s304 + $0x38] sm:$0xff]
      %v417 = vld [vmem:[%s304 + $0x40] sm:$0xff]
      %v418 = vld [vmem:[%s304 + $0x48] sm:$0xff]
      %v419 = vld [vmem:[%s304 + $0x50] sm:$0xff]
      %v420 = vld [vmem:[%s304 + $0x58] sm:$0xff]
      %v421 = vld [vmem:[%s304 + $0x60] sm:$0xff]
      %v422 = vld [vmem:[%s304 + $0x68] sm:$0xff]
      %v423 = vld [vmem:[%s304 + $0x70] sm:$0xff]
      %v424 = vld [vmem:[%s304 + $0x78] sm:$0xff]
      %v425 = vld [vmem:[%s314] sm:$0xff]
      %v426 = vld [vmem:[%s314 + $0x8] sm:$0xff]
      %v427 = vld [vmem:[%s314 + $0x10] sm:$0xff]
      %v428 = vld [vmem:[%s314 + $0x18] sm:$0xff]
      %v429 = vld [vmem:[%s314 + $0x20] sm:$0xff]
      %v430 = vld [vmem:[%s314 + $0x28] sm:$0xff]
      %v431 = vld [vmem:[%s314 + $0x30] sm:$0xff]
      %v432 = vld [vmem:[%s314 + $0x38] sm:$0xff]
      %v433 = vld [vmem:[%s314 + $0x40] sm:$0xff]
      %v434 = vld [vmem:[%s314 + $0x48] sm:$0xff]
      %v435 = vld [vmem:[%s314 + $0x50] sm:$0xff]
      %v436 = vld [vmem:[%s314 + $0x58] sm:$0xff]
      %v437 = vld [vmem:[%s314 + $0x60] sm:$0xff]
      %v438 = vld [vmem:[%s314 + $0x68] sm:$0xff]
      %v439 = vld [vmem:[%s314 + $0x70] sm:$0xff]
      %v440 = vld [vmem:[%s314 + $0x78] sm:$0xff]
      %457 = vrot.lane.b32.xlu0 %v409, 4
      %v458 = vpop.permute.xlu0 %457
      %459 = vrot.lane.b32.xlu0 %v410, 4
      %v460 = vpop.permute.xlu0 %459
      %461 = vrot.lane.b32.xlu0 %v411, 4
      %v462 = vpop.permute.xlu0 %461
      %463 = vrot.lane.b32.xlu0 %v412, 4
      %v464 = vpop.permute.xlu0 %463
      %465 = vrot.lane.b32.xlu0 %v413, 4
      %v466 = vpop.permute.xlu0 %465
      %467 = vrot.lane.b32.xlu0 %v414, 4
      %v468 = vpop.permute.xlu0 %467
      %469 = vrot.lane.b32.xlu0 %v415, 4
      %v470 = vpop.permute.xlu0 %469
      %471 = vrot.lane.b32.xlu0 %v416, 4
      %v472 = vpop.permute.xlu0 %471
      %473 = vrot.lane.b32.xlu0 %v417, 4
      %v474 = vpop.permute.xlu0 %473
      %475 = vrot.lane.b32.xlu0 %v418, 4
      %v476 = vpop.permute.xlu0 %475
      %477 = vrot.lane.b32.xlu0 %v419, 4
      %v478 = vpop.permute.xlu0 %477
      %479 = vrot.lane.b32.xlu0 %v420, 4
      %v480 = vpop.permute.xlu0 %479
      %481 = vrot.lane.b32.xlu0 %v421, 4
      %v482 = vpop.permute.xlu0 %481
      %483 = vrot.lane.b32.xlu0 %v422, 4
      %v484 = vpop.permute.xlu0 %483
      %485 = vrot.lane.b32.xlu0 %v423, 4
      %v486 = vpop.permute.xlu0 %485
      %487 = vrot.lane.b32.xlu0 %v424, 4
      %v488 = vpop.permute.xlu0 %487
      %s505 = scalar_lea.vmem [#allocation2], 24
      %vm506 = vcmask 64544
      %507 = vst.msk [vmem:[%s505] sm:$0xff] %vm506, %v458
      %508 = vst.msk [vmem:[%s505 + $0x8] sm:$0xff] %vm506, %v460
      %509 = vst.msk [vmem:[%s505 + $0x10] sm:$0xff] %vm506, %v462
      %510 = vst.msk [vmem:[%s505 + $0x18] sm:$0xff] %vm506, %v464
      %511 = vst.msk [vmem:[%s505 + $0x20] sm:$0xff] %vm506, %v466
      %512 = vst.msk [vmem:[%s505 + $0x28] sm:$0xff] %vm506, %v468
      %513 = vst.msk [vmem:[%s505 + $0x30] sm:$0xff] %vm506, %v470
      %514 = vst.msk [vmem:[%s505 + $0x38] sm:$0xff] %vm506, %v472
      %515 = vst.msk [vmem:[%s505 + $0x40] sm:$0xff] %vm506, %v474
      %516 = vst.msk [vmem:[%s505 + $0x48] sm:$0xff] %vm506, %v476
      %517 = vst.msk [vmem:[%s505 + $0x50] sm:$0xff] %vm506, %v478
      %518 = vst.msk [vmem:[%s505 + $0x58] sm:$0xff] %vm506, %v480
      %519 = vst.msk [vmem:[%s505 + $0x60] sm:$0xff] %vm506, %v482
      %520 = vst.msk [vmem:[%s505 + $0x68] sm:$0xff] %vm506, %v484
      %521 = vst.msk [vmem:[%s505 + $0x70] sm:$0xff] %vm506, %v486
      %522 = vst.msk [vmem:[%s505 + $0x78] sm:$0xff] %vm506, %v488
      %539 = vrot.lane.b32.xlu0 %v425, 8
      %v540 = vpop.permute.xlu0 %539
      %541 = vrot.lane.b32.xlu0 %v426, 8
      %v542 = vpop.permute.xlu0 %541
      %543 = vrot.lane.b32.xlu0 %v427, 8
      %v544 = vpop.permute.xlu0 %543
      %545 = vrot.lane.b32.xlu0 %v428, 8
      %v546 = vpop.permute.xlu0 %545
      %547 = vrot.lane.b32.xlu0 %v429, 8
      %v548 = vpop.permute.xlu0 %547
      %549 = vrot.lane.b32.xlu0 %v430, 8
      %v550 = vpop.permute.xlu0 %549
      %551 = vrot.lane.b32.xlu0 %v431, 8
      %v552 = vpop.permute.xlu0 %551
      %553 = vrot.lane.b32.xlu0 %v432, 8
      %v554 = vpop.permute.xlu0 %553
      %555 = vrot.lane.b32.xlu0 %v433, 8
      %v556 = vpop.permute.xlu0 %555
      %557 = vrot.lane.b32.xlu0 %v434, 8
      %v558 = vpop.permute.xlu0 %557
      %559 = vrot.lane.b32.xlu0 %v435, 8
      %v560 = vpop.permute.xlu0 %559
      %561 = vrot.lane.b32.xlu0 %v436, 8
      %v562 = vpop.permute.xlu0 %561
      %563 = vrot.lane.b32.xlu0 %v437, 8
      %v564 = vpop.permute.xlu0 %563
      %565 = vrot.lane.b32.xlu0 %v438, 8
      %v566 = vpop.permute.xlu0 %565
      %567 = vrot.lane.b32.xlu0 %v439, 8
      %v568 = vpop.permute.xlu0 %567
      %569 = vrot.lane.b32.xlu0 %v440, 8
      %v570 = vpop.permute.xlu0 %569
      %vm587 = vcmask 97344
      %588 = vst.msk [vmem:[%s505] sm:$0xff] %vm587, %v540
      %589 = vst.msk [vmem:[%s505 + $0x8] sm:$0xff] %vm587, %v542
      %590 = vst.msk [vmem:[%s505 + $0x10] sm:$0xff] %vm587, %v544
      %591 = vst.msk [vmem:[%s505 + $0x18] sm:$0xff] %vm587, %v546
      %592 = vst.msk [vmem:[%s505 + $0x20] sm:$0xff] %vm587, %v548
      %593 = vst.msk [vmem:[%s505 + $0x28] sm:$0xff] %vm587, %v550
      %594 = vst.msk [vmem:[%s505 + $0x30] sm:$0xff] %vm587, %v552
      %595 = vst.msk [vmem:[%s505 + $0x38] sm:$0xff] %vm587, %v554
      %596 = vst.msk [vmem:[%s505 + $0x40] sm:$0xff] %vm587, %v556
      %597 = vst.msk [vmem:[%s505 + $0x48] sm:$0xff] %vm587, %v558
      %598 = vst.msk [vmem:[%s505 + $0x50] sm:$0xff] %vm587, %v560
      %599 = vst.msk [vmem:[%s505 + $0x58] sm:$0xff] %vm587, %v562
      %600 = vst.msk [vmem:[%s505 + $0x60] sm:$0xff] %vm587, %v564
      %601 = vst.msk [vmem:[%s505 + $0x68] sm:$0xff] %vm587, %v566
      %602 = vst.msk [vmem:[%s505 + $0x70] sm:$0xff] %vm587, %v568
      %603 = vst.msk [vmem:[%s505 + $0x78] sm:$0xff] %vm587, %v570
      %vm604 = vcmask 30720
      %605 = vst.msk [vmem:[%s505 + $0x1] sm:$0x7f] %vm604, %v425
      %606 = vst.msk [vmem:[%s505 + $0x9] sm:$0x7f] %vm604, %v426
      %607 = vst.msk [vmem:[%s505 + $0x11] sm:$0x7f] %vm604, %v427
      %608 = vst.msk [vmem:[%s505 + $0x19] sm:$0x7f] %vm604, %v428
      %609 = vst.msk [vmem:[%s505 + $0x21] sm:$0x7f] %vm604, %v429
      %610 = vst.msk [vmem:[%s505 + $0x29] sm:$0x7f] %vm604, %v430
      %611 = vst.msk [vmem:[%s505 + $0x31] sm:$0x7f] %vm604, %v431
      %612 = vst.msk [vmem:[%s505 + $0x39] sm:$0x7f] %vm604, %v432
      %613 = vst.msk [vmem:[%s505 + $0x41] sm:$0x7f] %vm604, %v433
      %614 = vst.msk [vmem:[%s505 + $0x49] sm:$0x7f] %vm604, %v434
      %615 = vst.msk [vmem:[%s505 + $0x51] sm:$0x7f] %vm604, %v435
      %616 = vst.msk [vmem:[%s505 + $0x59] sm:$0x7f] %vm604, %v436
      %617 = vst.msk [vmem:[%s505 + $0x61] sm:$0x7f] %vm604, %v437
      %618 = vst.msk [vmem:[%s505 + $0x69] sm:$0x7f] %vm604, %v438
      %619 = vst.msk [vmem:[%s505 + $0x71] sm:$0x7f] %vm604, %v439
      %620 = vst.msk [vmem:[%s505 + $0x79] sm:$0x7f] %vm604, %v440
      %v621 = vld [vmem:[#allocation2] sm:$0xff]
      %v622 = vld [vmem:[#allocation2 + $0x8] sm:$0xff]
      %v623 = vld [vmem:[#allocation2 + $0x10] sm:$0xff]
      %v624 = vld [vmem:[#allocation2 + $0x18] sm:$0xff]
      %v625 = vld [vmem:[#allocation2 + $0x20] sm:$0xff]
      %v626 = vld [vmem:[#allocation2 + $0x28] sm:$0xff]
      %v627 = vld [vmem:[#allocation2 + $0x30] sm:$0xff]
      %v628 = vld [vmem:[#allocation2 + $0x38] sm:$0xff]
      %v629 = vld [vmem:[#allocation2 + $0x40] sm:$0xff]
      %v630 = vld [vmem:[#allocation2 + $0x48] sm:$0xff]
      %v631 = vld [vmem:[#allocation2 + $0x50] sm:$0xff]
      %v632 = vld [vmem:[#allocation2 + $0x58] sm:$0xff]
      %v633 = vld [vmem:[#allocation2 + $0x60] sm:$0xff]
      %v634 = vld [vmem:[#allocation2 + $0x68] sm:$0xff]
      %v635 = vld [vmem:[#allocation2 + $0x70] sm:$0xff]
      %v636 = vld [vmem:[#allocation2 + $0x78] sm:$0xff]
      %v637 = vld [vmem:[%s2] sm:$0xff]
      %v638 = vld [vmem:[%s2 + $0x8] sm:$0xf]
      %s639 = scalar_lea.vmem [#allocation2], 8
      %v640 = vld [vmem:[%s639] sm:$0xff]
      %v641 = vld [vmem:[%s639 + $0x8] sm:$0xff]
      %v642 = vld [vmem:[%s639 + $0x10] sm:$0xff]
      %v643 = vld [vmem:[%s639 + $0x18] sm:$0xff]
      %v644 = vld [vmem:[%s639 + $0x20] sm:$0xff]
      %v645 = vld [vmem:[%s639 + $0x28] sm:$0xff]
      %v646 = vld [vmem:[%s639 + $0x30] sm:$0xff]
      %v647 = vld [vmem:[%s639 + $0x38] sm:$0xff]
      %v648 = vld [vmem:[%s639 + $0x40] sm:$0xff]
      %v649 = vld [vmem:[%s639 + $0x48] sm:$0xff]
      %v650 = vld [vmem:[%s639 + $0x50] sm:$0xff]
      %v651 = vld [vmem:[%s639 + $0x58] sm:$0xff]
      %v652 = vld [vmem:[%s639 + $0x60] sm:$0xff]
      %v653 = vld [vmem:[%s639 + $0x68] sm:$0xff]
      %v654 = vld [vmem:[%s639 + $0x70] sm:$0xff]
      %v655 = vld [vmem:[%s639 + $0x78] sm:$0xff]
      %s656 = scalar_lea.vmem %s2, 16
      %v657 = vld [vmem:[%s656] sm:$0xff]
      %v658 = vld [vmem:[%s656 + $0x8] sm:$0xf]
      %vm659 = vcmask 97280
      %v661 = vsel %vm659, %v640, 0
      %v664 = vsel %vm659, %v641, 0
      %v667 = vsel %vm659, %v642, 0
      %v670 = vsel %vm659, %v643, 0
      %v673 = vsel %vm659, %v644, 0
      %v676 = vsel %vm659, %v645, 0
      %v679 = vsel %vm659, %v646, 0
      %v682 = vsel %vm659, %v647, 0
      %v685 = vsel %vm659, %v648, 0
      %v688 = vsel %vm659, %v649, 0
      %v691 = vsel %vm659, %v650, 0
      %v694 = vsel %vm659, %v651, 0
      %v697 = vsel %vm659, %v652, 0
      %v700 = vsel %vm659, %v653, 0
      %v703 = vsel %vm659, %v654, 0
      %v706 = vsel %vm659, %v655, 0
      %vm708 = vcmask 1043456
      %v710 = vsel %vm708, %v658, 0
      %712 = vmatprep.subr.mxu0 0.0
      %713 = vmatpush1.msra.mxu0 0.0
      %714 = vmatprep.subr.mxu0 0.0
      %715 = vmatpush1.msra.mxu0 0.0
      %716 = vmatprep.subr.mxu0 0.0
      %717 = vmatpush1.msra.mxu0 0.0
      %718 = vmatprep.subr.mxu0 0.0
      %719 = vmatpush1.msra.mxu0 0.0
      %720 = vmatprep.subr.mxu0 0.0
      %721 = vmatpush1.msra.mxu0 0.0
      %722 = vmatprep.subr.mxu0 0.0
      %723 = vmatpush1.msra.mxu0 0.0
      %724 = vmatprep.subr.mxu0 0.0
      %725 = vmatpush1.msra.mxu0 0.0
      %726 = vmatprep.subr.mxu0 0.0
      %727 = vmatpush1.msra.mxu0 0.0
      %728 = vmatprep.subr.mxu0 0.0
      %729 = vmatpush1.msra.mxu0 0.0
      %730 = vmatprep.subr.mxu0 0.0
      %731 = vmatpush1.msra.mxu0 0.0
      %732 = vmatprep.subr.mxu0 0.0
      %733 = vmatpush1.msra.mxu0 0.0
      %734 = vmatprep.subr.mxu0 0.0
      %735 = vmatpush1.msra.mxu0 0.0
      %736 = vmatprep.subr.mxu0 0.0
      %737 = vmatpush1.msra.mxu0 0.0
      %738 = vmatprep.subr.mxu0 0.0
      %739 = vmatpush1.msra.mxu0 0.0
      %740 = vmatprep.subr.mxu0 0.0
      %741 = vmatpush1.msra.mxu0 %v710
      %742 = vmatprep.subr.mxu0 0.0
      %743 = vmatpush1.msra.mxu0 %v657
      %744 = vmatprep.subr.mxu0 0.0
      %745 = vmatpush2.msra.mxu0 0.0
      %746 = vmatprep.subr.mxu0 0.0
      %747 = vmatpush2.msra.mxu0 0.0
      %748 = vmatprep.subr.mxu0 0.0
      %749 = vmatpush2.msra.mxu0 0.0
      %750 = vmatprep.subr.mxu0 0.0
      %751 = vmatpush2.msra.mxu0 0.0
      %752 = vmatprep.subr.mxu0 0.0
      %753 = vmatpush2.msra.mxu0 0.0
      %754 = vmatprep.subr.mxu0 0.0
      %755 = vmatpush2.msra.mxu0 0.0
      %756 = vmatprep.subr.mxu0 0.0
      %757 = vmatpush2.msra.mxu0 0.0
      %758 = vmatprep.subr.mxu0 0.0
      %759 = vmatpush2.msra.mxu0 0.0
      %760 = vmatprep.subr.mxu0 0.0
      %761 = vmatpush2.msra.mxu0 0.0
      %762 = vmatprep.subr.mxu0 0.0
      %763 = vmatpush2.msra.mxu0 0.0
      %764 = vmatprep.subr.mxu0 0.0
      %765 = vmatpush2.msra.mxu0 0.0
      %766 = vmatprep.subr.mxu0 0.0
      %767 = vmatpush2.msra.mxu0 0.0
      %768 = vmatprep.subr.mxu0 0.0
      %769 = vmatpush2.msra.mxu0 0.0
      %770 = vmatprep.subr.mxu0 0.0
      %771 = vmatpush2.msra.mxu0 0.0
      %772 = vmatprep.subr.mxu0 0.0
      %773 = vmatpush2.msra.mxu0 0.0
      %774 = vmatprep.subr.mxu0 0.0
      %775 = vmatpush2.msra.mxu0 0.0
      %776 = vmatprep.mubr.f32.mxu0 0.0
      %777 = vmatmul.mubr.f32.gmra.mxu0 %v661
      %v778 = vpop.f32.mrf.mxu0
      %v779 = vadd.f32 0.0, %v778
      %v780 = vpop.f32.mrf.mxu0
      %781 = vmatprep.mubr.f32.mxu0 0.0
      %782 = vmatmul.mubr.f32.gmra.mxu0 %v664
      %v783 = vpop.f32.mrf.mxu0
      %v784 = vadd.f32 0.0, %v783
      %v785 = vpop.f32.mrf.mxu0
      %786 = vmatprep.mubr.f32.mxu0 0.0
      %787 = vmatmul.mubr.f32.gmra.mxu0 %v667
      %v788 = vpop.f32.mrf.mxu0
      %v789 = vadd.f32 0.0, %v788
      %v790 = vpop.f32.mrf.mxu0
      %791 = vmatprep.mubr.f32.mxu0 0.0
      %792 = vmatmul.mubr.f32.gmra.mxu0 %v670
      %v793 = vpop.f32.mrf.mxu0
      %v794 = vadd.f32 0.0, %v793
      %v795 = vpop.f32.mrf.mxu0
      %796 = vmatprep.mubr.f32.mxu0 0.0
      %797 = vmatmul.mubr.f32.gmra.mxu0 %v673
      %v798 = vpop.f32.mrf.mxu0
      %v799 = vadd.f32 0.0, %v798
      %v800 = vpop.f32.mrf.mxu0
      %801 = vmatprep.mubr.f32.mxu0 0.0
      %802 = vmatmul.mubr.f32.gmra.mxu0 %v676
      %v803 = vpop.f32.mrf.mxu0
      %v804 = vadd.f32 0.0, %v803
      %v805 = vpop.f32.mrf.mxu0
      %806 = vmatprep.mubr.f32.mxu0 0.0
      %807 = vmatmul.mubr.f32.gmra.mxu0 %v679
      %v808 = vpop.f32.mrf.mxu0
      %v809 = vadd.f32 0.0, %v808
      %v810 = vpop.f32.mrf.mxu0
      %811 = vmatprep.mubr.f32.mxu0 0.0
      %812 = vmatmul.mubr.f32.gmra.mxu0 %v682
      %v813 = vpop.f32.mrf.mxu0
      %v814 = vadd.f32 0.0, %v813
      %v815 = vpop.f32.mrf.mxu0
      %816 = vmatprep.mubr.f32.mxu0 0.0
      %817 = vmatmul.mubr.f32.gmra.mxu0 %v685
      %v818 = vpop.f32.mrf.mxu0
      %v819 = vadd.f32 0.0, %v818
      %v820 = vpop.f32.mrf.mxu0
      %821 = vmatprep.mubr.f32.mxu0 0.0
      %822 = vmatmul.mubr.f32.gmra.mxu0 %v688
      %v823 = vpop.f32.mrf.mxu0
      %v824 = vadd.f32 0.0, %v823
      %v825 = vpop.f32.mrf.mxu0
      %826 = vmatprep.mubr.f32.mxu0 0.0
      %827 = vmatmul.mubr.f32.gmra.mxu0 %v691
      %v828 = vpop.f32.mrf.mxu0
      %v829 = vadd.f32 0.0, %v828
      %v830 = vpop.f32.mrf.mxu0
      %831 = vmatprep.mubr.f32.mxu0 0.0
      %832 = vmatmul.mubr.f32.gmra.mxu0 %v694
      %v833 = vpop.f32.mrf.mxu0
      %v834 = vadd.f32 0.0, %v833
      %v835 = vpop.f32.mrf.mxu0
      %836 = vmatprep.mubr.f32.mxu0 0.0
      %837 = vmatmul.mubr.f32.gmra.mxu0 %v697
      %v838 = vpop.f32.mrf.mxu0
      %v839 = vadd.f32 0.0, %v838
      %v840 = vpop.f32.mrf.mxu0
      %841 = vmatprep.mubr.f32.mxu0 0.0
      %842 = vmatmul.mubr.f32.gmra.mxu0 %v700
      %v843 = vpop.f32.mrf.mxu0
      %v844 = vadd.f32 0.0, %v843
      %v845 = vpop.f32.mrf.mxu0
      %846 = vmatprep.mubr.f32.mxu0 0.0
      %847 = vmatmul.mubr.f32.gmra.mxu0 %v703
      %v848 = vpop.f32.mrf.mxu0
      %v849 = vadd.f32 0.0, %v848
      %v850 = vpop.f32.mrf.mxu0
      %851 = vmatprep.mubr.f32.mxu0 0.0
      %852 = vmatmul.mubr.f32.gmra.mxu0 %v706
      %v853 = vpop.f32.mrf.mxu0
      %v854 = vadd.f32 0.0, %v853
      %v855 = vpop.f32.mrf.mxu0
      %856 = vdwg.mxu0
      %v858 = vsel %vm659, %v621, 0
      %v861 = vsel %vm659, %v622, 0
      %v864 = vsel %vm659, %v623, 0
      %v867 = vsel %vm659, %v624, 0
      %v870 = vsel %vm659, %v625, 0
      %v873 = vsel %vm659, %v626, 0
      %v876 = vsel %vm659, %v627, 0
      %v879 = vsel %vm659, %v628, 0
      %v882 = vsel %vm659, %v629, 0
      %v885 = vsel %vm659, %v630, 0
      %v888 = vsel %vm659, %v631, 0
      %v891 = vsel %vm659, %v632, 0
      %v894 = vsel %vm659, %v633, 0
      %v897 = vsel %vm659, %v634, 0
      %v900 = vsel %vm659, %v635, 0
      %v903 = vsel %vm659, %v636, 0
      %v906 = vsel %vm708, %v638, 0
      %908 = vmatprep.subr.mxu0 0.0
      %909 = vmatpush1.msra.mxu0 0.0
      %910 = vmatprep.subr.mxu0 0.0
      %911 = vmatpush1.msra.mxu0 0.0
      %912 = vmatprep.subr.mxu0 0.0
      %913 = vmatpush1.msra.mxu0 0.0
      %914 = vmatprep.subr.mxu0 0.0
      %915 = vmatpush1.msra.mxu0 0.0
      %916 = vmatprep.subr.mxu0 0.0
      %917 = vmatpush1.msra.mxu0 0.0
      %918 = vmatprep.subr.mxu0 0.0
      %919 = vmatpush1.msra.mxu0 0.0
      %920 = vmatprep.subr.mxu0 0.0
      %921 = vmatpush1.msra.mxu0 0.0
      %922 = vmatprep.subr.mxu0 0.0
      %923 = vmatpush1.msra.mxu0 0.0
      %924 = vmatprep.subr.mxu0 0.0
      %925 = vmatpush1.msra.mxu0 0.0
      %926 = vmatprep.subr.mxu0 0.0
      %927 = vmatpush1.msra.mxu0 0.0
      %928 = vmatprep.subr.mxu0 0.0
      %929 = vmatpush1.msra.mxu0 0.0
      %930 = vmatprep.subr.mxu0 0.0
      %931 = vmatpush1.msra.mxu0 0.0
      %932 = vmatprep.subr.mxu0 0.0
      %933 = vmatpush1.msra.mxu0 0.0
      %934 = vmatprep.subr.mxu0 0.0
      %935 = vmatpush1.msra.mxu0 0.0
      %936 = vmatprep.subr.mxu0 0.0
      %937 = vmatpush1.msra.mxu0 %v906
      %938 = vmatprep.subr.mxu0 0.0
      %939 = vmatpush1.msra.mxu0 %v637
      %940 = vmatprep.subr.mxu0 0.0
      %941 = vmatpush2.msra.mxu0 0.0
      %942 = vmatprep.subr.mxu0 0.0
      %943 = vmatpush2.msra.mxu0 0.0
      %944 = vmatprep.subr.mxu0 0.0
      %945 = vmatpush2.msra.mxu0 0.0
      %946 = vmatprep.subr.mxu0 0.0
      %947 = vmatpush2.msra.mxu0 0.0
      %948 = vmatprep.subr.mxu0 0.0
      %949 = vmatpush2.msra.mxu0 0.0
      %950 = vmatprep.subr.mxu0 0.0
      %951 = vmatpush2.msra.mxu0 0.0
      %952 = vmatprep.subr.mxu0 0.0
      %953 = vmatpush2.msra.mxu0 0.0
      %954 = vmatprep.subr.mxu0 0.0
      %955 = vmatpush2.msra.mxu0 0.0
      %956 = vmatprep.subr.mxu0 0.0
      %957 = vmatpush2.msra.mxu0 0.0
      %958 = vmatprep.subr.mxu0 0.0
      %959 = vmatpush2.msra.mxu0 0.0
      %960 = vmatprep.subr.mxu0 0.0
      %961 = vmatpush2.msra.mxu0 0.0
      %962 = vmatprep.subr.mxu0 0.0
      %963 = vmatpush2.msra.mxu0 0.0
      %964 = vmatprep.subr.mxu0 0.0
      %965 = vmatpush2.msra.mxu0 0.0
      %966 = vmatprep.subr.mxu0 0.0
      %967 = vmatpush2.msra.mxu0 0.0
      %968 = vmatprep.subr.mxu0 0.0
      %969 = vmatpush2.msra.mxu0 0.0
      %970 = vmatprep.subr.mxu0 0.0
      %971 = vmatpush2.msra.mxu0 0.0
      %972 = vmatprep.mubr.f32.mxu0 0.0
      %973 = vmatmul.mubr.f32.gmra.mxu0 %v858
      %v974 = vpop.f32.mrf.mxu0
      %v975 = vadd.f32 %v779, %v974
      %v976 = vpop.f32.mrf.mxu0
      %977 = vmatprep.mubr.f32.mxu0 0.0
      %978 = vmatmul.mubr.f32.gmra.mxu0 %v861
      %v979 = vpop.f32.mrf.mxu0
      %v980 = vadd.f32 %v784, %v979
      %v981 = vpop.f32.mrf.mxu0
      %982 = vmatprep.mubr.f32.mxu0 0.0
      %983 = vmatmul.mubr.f32.gmra.mxu0 %v864
      %v984 = vpop.f32.mrf.mxu0
      %v985 = vadd.f32 %v789, %v984
      %v986 = vpop.f32.mrf.mxu0
      %987 = vmatprep.mubr.f32.mxu0 0.0
      %988 = vmatmul.mubr.f32.gmra.mxu0 %v867
      %v989 = vpop.f32.mrf.mxu0
      %v990 = vadd.f32 %v794, %v989
      %v991 = vpop.f32.mrf.mxu0
      %992 = vmatprep.mubr.f32.mxu0 0.0
      %993 = vmatmul.mubr.f32.gmra.mxu0 %v870
      %v994 = vpop.f32.mrf.mxu0
      %v995 = vadd.f32 %v799, %v994
      %v996 = vpop.f32.mrf.mxu0
      %997 = vmatprep.mubr.f32.mxu0 0.0
      %998 = vmatmul.mubr.f32.gmra.mxu0 %v873
      %v999 = vpop.f32.mrf.mxu0
      %v1000 = vadd.f32 %v804, %v999
      %v1001 = vpop.f32.mrf.mxu0
      %1002 = vmatprep.mubr.f32.mxu0 0.0
      %1003 = vmatmul.mubr.f32.gmra.mxu0 %v876
      %v1004 = vpop.f32.mrf.mxu0
      %v1005 = vadd.f32 %v809, %v1004
      %v1006 = vpop.f32.mrf.mxu0
      %1007 = vmatprep.mubr.f32.mxu0 0.0
      %1008 = vmatmul.mubr.f32.gmra.mxu0 %v879
      %v1009 = vpop.f32.mrf.mxu0
      %v1010 = vadd.f32 %v814, %v1009
      %v1011 = vpop.f32.mrf.mxu0
      %1012 = vmatprep.mubr.f32.mxu0 0.0
      %1013 = vmatmul.mubr.f32.gmra.mxu0 %v882
      %v1014 = vpop.f32.mrf.mxu0
      %v1015 = vadd.f32 %v819, %v1014
      %v1016 = vpop.f32.mrf.mxu0
      %1017 = vmatprep.mubr.f32.mxu0 0.0
      %1018 = vmatmul.mubr.f32.gmra.mxu0 %v885
      %v1019 = vpop.f32.mrf.mxu0
      %v1020 = vadd.f32 %v824, %v1019
      %v1021 = vpop.f32.mrf.mxu0
      %1022 = vmatprep.mubr.f32.mxu0 0.0
      %1023 = vmatmul.mubr.f32.gmra.mxu0 %v888
      %v1024 = vpop.f32.mrf.mxu0
      %v1025 = vadd.f32 %v829, %v1024
      %v1026 = vpop.f32.mrf.mxu0
      %1027 = vmatprep.mubr.f32.mxu0 0.0
      %1028 = vmatmul.mubr.f32.gmra.mxu0 %v891
      %v1029 = vpop.f32.mrf.mxu0
      %v1030 = vadd.f32 %v834, %v1029
      %v1031 = vpop.f32.mrf.mxu0
      %1032 = vmatprep.mubr.f32.mxu0 0.0
      %1033 = vmatmul.mubr.f32.gmra.mxu0 %v894
      %v1034 = vpop.f32.mrf.mxu0
      %v1035 = vadd.f32 %v839, %v1034
      %v1036 = vpop.f32.mrf.mxu0
      %1037 = vmatprep.mubr.f32.mxu0 0.0
      %1038 = vmatmul.mubr.f32.gmra.mxu0 %v897
      %v1039 = vpop.f32.mrf.mxu0
      %v1040 = vadd.f32 %v844, %v1039
      %v1041 = vpop.f32.mrf.mxu0
      %1042 = vmatprep.mubr.f32.mxu0 0.0
      %1043 = vmatmul.mubr.f32.gmra.mxu0 %v900
      %v1044 = vpop.f32.mrf.mxu0
      %v1045 = vadd.f32 %v849, %v1044
      %v1046 = vpop.f32.mrf.mxu0
      %1047 = vmatprep.mubr.f32.mxu0 0.0
      %1048 = vmatmul.mubr.f32.gmra.mxu0 %v903
      %v1049 = vpop.f32.mrf.mxu0
      %v1050 = vadd.f32 %v854, %v1049
      %v1051 = vpop.f32.mrf.mxu0
      %1052 = vdwg.mxu0
      %s1053 = scalar_lea.vmem [#allocation2], 16
      %v1054 = vld [vmem:[%s1053] sm:$0xff]
      %v1055 = vld [vmem:[%s1053 + $0x8] sm:$0xff]
      %v1056 = vld [vmem:[%s1053 + $0x10] sm:$0xff]
      %v1057 = vld [vmem:[%s1053 + $0x18] sm:$0xff]
      %v1058 = vld [vmem:[%s1053 + $0x20] sm:$0xff]
      %v1059 = vld [vmem:[%s1053 + $0x28] sm:$0xff]
      %v1060 = vld [vmem:[%s1053 + $0x30] sm:$0xff]
      %v1061 = vld [vmem:[%s1053 + $0x38] sm:$0xff]
      %v1062 = vld [vmem:[%s1053 + $0x40] sm:$0xff]
      %v1063 = vld [vmem:[%s1053 + $0x48] sm:$0xff]
      %v1064 = vld [vmem:[%s1053 + $0x50] sm:$0xff]
      %v1065 = vld [vmem:[%s1053 + $0x58] sm:$0xff]
      %v1066 = vld [vmem:[%s1053 + $0x60] sm:$0xff]
      %v1067 = vld [vmem:[%s1053 + $0x68] sm:$0xff]
      %v1068 = vld [vmem:[%s1053 + $0x70] sm:$0xff]
      %v1069 = vld [vmem:[%s1053 + $0x78] sm:$0xff]
      %s1070 = scalar_lea.vmem %s2, 32
      %v1071 = vld [vmem:[%s1070] sm:$0xff]
      %v1072 = vld [vmem:[%s1070 + $0x8] sm:$0xf]
      %v1074 = vsel %vm659, %v1054, 0
      %v1077 = vsel %vm659, %v1055, 0
      %v1080 = vsel %vm659, %v1056, 0
      %v1083 = vsel %vm659, %v1057, 0
      %v1086 = vsel %vm659, %v1058, 0
      %v1089 = vsel %vm659, %v1059, 0
      %v1092 = vsel %vm659, %v1060, 0
      %v1095 = vsel %vm659, %v1061, 0
      %v1098 = vsel %vm659, %v1062, 0
      %v1101 = vsel %vm659, %v1063, 0
      %v1104 = vsel %vm659, %v1064, 0
      %v1107 = vsel %vm659, %v1065, 0
      %v1110 = vsel %vm659, %v1066, 0
      %v1113 = vsel %vm659, %v1067, 0
      %v1116 = vsel %vm659, %v1068, 0
      %v1119 = vsel %vm659, %v1069, 0
      %v1122 = vsel %vm708, %v1072, 0
      %1124 = vmatprep.subr.mxu0 0.0
      %1125 = vmatpush1.msra.mxu0 0.0
      %1126 = vmatprep.subr.mxu0 0.0
      %1127 = vmatpush1.msra.mxu0 0.0
      %1128 = vmatprep.subr.mxu0 0.0
      %1129 = vmatpush1.msra.mxu0 0.0
      %1130 = vmatprep.subr.mxu0 0.0
      %1131 = vmatpush1.msra.mxu0 0.0
      %1132 = vmatprep.subr.mxu0 0.0
      %1133 = vmatpush1.msra.mxu0 0.0
      %1134 = vmatprep.subr.mxu0 0.0
      %1135 = vmatpush1.msra.mxu0 0.0
      %1136 = vmatprep.subr.mxu0 0.0
      %1137 = vmatpush1.msra.mxu0 0.0
      %1138 = vmatprep.subr.mxu0 0.0
      %1139 = vmatpush1.msra.mxu0 0.0
      %1140 = vmatprep.subr.mxu0 0.0
      %1141 = vmatpush1.msra.mxu0 0.0
      %1142 = vmatprep.subr.mxu0 0.0
      %1143 = vmatpush1.msra.mxu0 0.0
      %1144 = vmatprep.subr.mxu0 0.0
      %1145 = vmatpush1.msra.mxu0 0.0
      %1146 = vmatprep.subr.mxu0 0.0
      %1147 = vmatpush1.msra.mxu0 0.0
      %1148 = vmatprep.subr.mxu0 0.0
      %1149 = vmatpush1.msra.mxu0 0.0
      %1150 = vmatprep.subr.mxu0 0.0
      %1151 = vmatpush1.msra.mxu0 0.0
      %1152 = vmatprep.subr.mxu0 0.0
      %1153 = vmatpush1.msra.mxu0 %v1122
      %1154 = vmatprep.subr.mxu0 0.0
      %1155 = vmatpush1.msra.mxu0 %v1071
      %1156 = vmatprep.subr.mxu0 0.0
      %1157 = vmatpush2.msra.mxu0 0.0
      %1158 = vmatprep.subr.mxu0 0.0
      %1159 = vmatpush2.msra.mxu0 0.0
      %1160 = vmatprep.subr.mxu0 0.0
      %1161 = vmatpush2.msra.mxu0 0.0
      %1162 = vmatprep.subr.mxu0 0.0
      %1163 = vmatpush2.msra.mxu0 0.0
      %1164 = vmatprep.subr.mxu0 0.0
      %1165 = vmatpush2.msra.mxu0 0.0
      %1166 = vmatprep.subr.mxu0 0.0
      %1167 = vmatpush2.msra.mxu0 0.0
      %1168 = vmatprep.subr.mxu0 0.0
      %1169 = vmatpush2.msra.mxu0 0.0
      %1170 = vmatprep.subr.mxu0 0.0
      %1171 = vmatpush2.msra.mxu0 0.0
      %1172 = vmatprep.subr.mxu0 0.0
      %1173 = vmatpush2.msra.mxu0 0.0
      %1174 = vmatprep.subr.mxu0 0.0
      %1175 = vmatpush2.msra.mxu0 0.0
      %1176 = vmatprep.subr.mxu0 0.0
      %1177 = vmatpush2.msra.mxu0 0.0
      %1178 = vmatprep.subr.mxu0 0.0
      %1179 = vmatpush2.msra.mxu0 0.0
      %1180 = vmatprep.subr.mxu0 0.0
      %1181 = vmatpush2.msra.mxu0 0.0
      %1182 = vmatprep.subr.mxu0 0.0
      %1183 = vmatpush2.msra.mxu0 0.0
      %1184 = vmatprep.subr.mxu0 0.0
      %1185 = vmatpush2.msra.mxu0 0.0
      %1186 = vmatprep.subr.mxu0 0.0
      %1187 = vmatpush2.msra.mxu0 0.0
      %1188 = vmatprep.mubr.f32.mxu0 0.0
      %1189 = vmatmul.mubr.f32.gmra.mxu0 %v1074
      %v1190 = vpop.f32.mrf.mxu0
      %v1191 = vadd.f32 0.0, %v1190
      %v1192 = vpop.f32.mrf.mxu0
      %1193 = vmatprep.mubr.f32.mxu0 0.0
      %1194 = vmatmul.mubr.f32.gmra.mxu0 %v1077
      %v1195 = vpop.f32.mrf.mxu0
      %v1196 = vadd.f32 0.0, %v1195
      %v1197 = vpop.f32.mrf.mxu0
      %1198 = vmatprep.mubr.f32.mxu0 0.0
      %1199 = vmatmul.mubr.f32.gmra.mxu0 %v1080
      %v1200 = vpop.f32.mrf.mxu0
      %v1201 = vadd.f32 0.0, %v1200
      %v1202 = vpop.f32.mrf.mxu0
      %1203 = vmatprep.mubr.f32.mxu0 0.0
      %1204 = vmatmul.mubr.f32.gmra.mxu0 %v1083
      %v1205 = vpop.f32.mrf.mxu0
      %v1206 = vadd.f32 0.0, %v1205
      %v1207 = vpop.f32.mrf.mxu0
      %1208 = vmatprep.mubr.f32.mxu0 0.0
      %1209 = vmatmul.mubr.f32.gmra.mxu0 %v1086
      %v1210 = vpop.f32.mrf.mxu0
      %v1211 = vadd.f32 0.0, %v1210
      %v1212 = vpop.f32.mrf.mxu0
      %1213 = vmatprep.mubr.f32.mxu0 0.0
      %1214 = vmatmul.mubr.f32.gmra.mxu0 %v1089
      %v1215 = vpop.f32.mrf.mxu0
      %v1216 = vadd.f32 0.0, %v1215
      %v1217 = vpop.f32.mrf.mxu0
      %1218 = vmatprep.mubr.f32.mxu0 0.0
      %1219 = vmatmul.mubr.f32.gmra.mxu0 %v1092
      %v1220 = vpop.f32.mrf.mxu0
      %v1221 = vadd.f32 0.0, %v1220
      %v1222 = vpop.f32.mrf.mxu0
      %1223 = vmatprep.mubr.f32.mxu0 0.0
      %1224 = vmatmul.mubr.f32.gmra.mxu0 %v1095
      %v1225 = vpop.f32.mrf.mxu0
      %v1226 = vadd.f32 0.0, %v1225
      %v1227 = vpop.f32.mrf.mxu0
      %1228 = vmatprep.mubr.f32.mxu0 0.0
      %1229 = vmatmul.mubr.f32.gmra.mxu0 %v1098
      %v1230 = vpop.f32.mrf.mxu0
      %v1231 = vadd.f32 0.0, %v1230
      %v1232 = vpop.f32.mrf.mxu0
      %1233 = vmatprep.mubr.f32.mxu0 0.0
      %1234 = vmatmul.mubr.f32.gmra.mxu0 %v1101
      %v1235 = vpop.f32.mrf.mxu0
      %v1236 = vadd.f32 0.0, %v1235
      %v1237 = vpop.f32.mrf.mxu0
      %1238 = vmatprep.mubr.f32.mxu0 0.0
      %1239 = vmatmul.mubr.f32.gmra.mxu0 %v1104
      %v1240 = vpop.f32.mrf.mxu0
      %v1241 = vadd.f32 0.0, %v1240
      %v1242 = vpop.f32.mrf.mxu0
      %1243 = vmatprep.mubr.f32.mxu0 0.0
      %1244 = vmatmul.mubr.f32.gmra.mxu0 %v1107
      %v1245 = vpop.f32.mrf.mxu0
      %v1246 = vadd.f32 0.0, %v1245
      %v1247 = vpop.f32.mrf.mxu0
      %1248 = vmatprep.mubr.f32.mxu0 0.0
      %1249 = vmatmul.mubr.f32.gmra.mxu0 %v1110
      %v1250 = vpop.f32.mrf.mxu0
      %v1251 = vadd.f32 0.0, %v1250
      %v1252 = vpop.f32.mrf.mxu0
      %1253 = vmatprep.mubr.f32.mxu0 0.0
      %1254 = vmatmul.mubr.f32.gmra.mxu0 %v1113
      %v1255 = vpop.f32.mrf.mxu0
      %v1256 = vadd.f32 0.0, %v1255
      %v1257 = vpop.f32.mrf.mxu0
      %1258 = vmatprep.mubr.f32.mxu0 0.0
      %1259 = vmatmul.mubr.f32.gmra.mxu0 %v1116
      %v1260 = vpop.f32.mrf.mxu0
      %v1261 = vadd.f32 0.0, %v1260
      %v1262 = vpop.f32.mrf.mxu0
      %1263 = vmatprep.mubr.f32.mxu0 0.0
      %1264 = vmatmul.mubr.f32.gmra.mxu0 %v1119
      %v1265 = vpop.f32.mrf.mxu0
      %v1266 = vadd.f32 0.0, %v1265
      %v1267 = vpop.f32.mrf.mxu0
      %1268 = vdwg.mxu0
      %v1269 = vadd.f32 %v975, %v1191
      %v1270 = vadd.f32 %v980, %v1196
      %v1271 = vadd.f32 %v985, %v1201
      %v1272 = vadd.f32 %v990, %v1206
      %v1273 = vadd.f32 %v995, %v1211
      %v1274 = vadd.f32 %v1000, %v1216
      %v1275 = vadd.f32 %v1005, %v1221
      %v1276 = vadd.f32 %v1010, %v1226
      %v1277 = vadd.f32 %v1015, %v1231
      %v1278 = vadd.f32 %v1020, %v1236
      %v1279 = vadd.f32 %v1025, %v1241
      %v1280 = vadd.f32 %v1030, %v1246
      %v1281 = vadd.f32 %v1035, %v1251
      %v1282 = vadd.f32 %v1040, %v1256
      %v1283 = vadd.f32 %v1045, %v1261
      %v1284 = vadd.f32 %v1050, %v1266
      %v1285 = vld [vmem:[%s505] sm:$0xff]
      %v1286 = vld [vmem:[%s505 + $0x8] sm:$0xff]
      %v1287 = vld [vmem:[%s505 + $0x10] sm:$0xff]
      %v1288 = vld [vmem:[%s505 + $0x18] sm:$0xff]
      %v1289 = vld [vmem:[%s505 + $0x20] sm:$0xff]
      %v1290 = vld [vmem:[%s505 + $0x28] sm:$0xff]
      %v1291 = vld [vmem:[%s505 + $0x30] sm:$0xff]
      %v1292 = vld [vmem:[%s505 + $0x38] sm:$0xff]
      %v1293 = vld [vmem:[%s505 + $0x40] sm:$0xff]
      %v1294 = vld [vmem:[%s505 + $0x48] sm:$0xff]
      %v1295 = vld [vmem:[%s505 + $0x50] sm:$0xff]
      %v1296 = vld [vmem:[%s505 + $0x58] sm:$0xff]
      %v1297 = vld [vmem:[%s505 + $0x60] sm:$0xff]
      %v1298 = vld [vmem:[%s505 + $0x68] sm:$0xff]
      %v1299 = vld [vmem:[%s505 + $0x70] sm:$0xff]
      %v1300 = vld [vmem:[%s505 + $0x78] sm:$0xff]
      %s1301 = scalar_lea.vmem %s2, 48
      %v1302 = vld [vmem:[%s1301] sm:$0xff]
      %v1303 = vld [vmem:[%s1301 + $0x8] sm:$0xf]
      %v1305 = vsel %vm659, %v1285, 0
      %v1308 = vsel %vm659, %v1286, 0
      %v1311 = vsel %vm659, %v1287, 0
      %v1314 = vsel %vm659, %v1288, 0
      %v1317 = vsel %vm659, %v1289, 0
      %v1320 = vsel %vm659, %v1290, 0
      %v1323 = vsel %vm659, %v1291, 0
      %v1326 = vsel %vm659, %v1292, 0
      %v1329 = vsel %vm659, %v1293, 0
      %v1332 = vsel %vm659, %v1294, 0
      %v1335 = vsel %vm659, %v1295, 0
      %v1338 = vsel %vm659, %v1296, 0
      %v1341 = vsel %vm659, %v1297, 0
      %v1344 = vsel %vm659, %v1298, 0
      %v1347 = vsel %vm659, %v1299, 0
      %v1350 = vsel %vm659, %v1300, 0
      %v1353 = vsel %vm708, %v1303, 0
      %1355 = vmatprep.subr.mxu0 0.0
      %1356 = vmatpush1.msra.mxu0 0.0
      %1357 = vmatprep.subr.mxu0 0.0
      %1358 = vmatpush1.msra.mxu0 0.0
      %1359 = vmatprep.subr.mxu0 0.0
      %1360 = vmatpush1.msra.mxu0 0.0
      %1361 = vmatprep.subr.mxu0 0.0
      %1362 = vmatpush1.msra.mxu0 0.0
      %1363 = vmatprep.subr.mxu0 0.0
      %1364 = vmatpush1.msra.mxu0 0.0
      %1365 = vmatprep.subr.mxu0 0.0
      %1366 = vmatpush1.msra.mxu0 0.0
      %1367 = vmatprep.subr.mxu0 0.0
      %1368 = vmatpush1.msra.mxu0 0.0
      %1369 = vmatprep.subr.mxu0 0.0
      %1370 = vmatpush1.msra.mxu0 0.0
      %1371 = vmatprep.subr.mxu0 0.0
      %1372 = vmatpush1.msra.mxu0 0.0
      %1373 = vmatprep.subr.mxu0 0.0
      %1374 = vmatpush1.msra.mxu0 0.0
      %1375 = vmatprep.subr.mxu0 0.0
      %1376 = vmatpush1.msra.mxu0 0.0
      %1377 = vmatprep.subr.mxu0 0.0
      %1378 = vmatpush1.msra.mxu0 0.0
      %1379 = vmatprep.subr.mxu0 0.0
      %1380 = vmatpush1.msra.mxu0 0.0
      %1381 = vmatprep.subr.mxu0 0.0
      %1382 = vmatpush1.msra.mxu0 0.0
      %1383 = vmatprep.subr.mxu0 0.0
      %1384 = vmatpush1.msra.mxu0 %v1353
      %1385 = vmatprep.subr.mxu0 0.0
      %1386 = vmatpush1.msra.mxu0 %v1302
      %1387 = vmatprep.subr.mxu0 0.0
      %1388 = vmatpush2.msra.mxu0 0.0
      %1389 = vmatprep.subr.mxu0 0.0
      %1390 = vmatpush2.msra.mxu0 0.0
      %1391 = vmatprep.subr.mxu0 0.0
      %1392 = vmatpush2.msra.mxu0 0.0
      %1393 = vmatprep.subr.mxu0 0.0
      %1394 = vmatpush2.msra.mxu0 0.0
      %1395 = vmatprep.subr.mxu0 0.0
      %1396 = vmatpush2.msra.mxu0 0.0
      %1397 = vmatprep.subr.mxu0 0.0
      %1398 = vmatpush2.msra.mxu0 0.0
      %1399 = vmatprep.subr.mxu0 0.0
      %1400 = vmatpush2.msra.mxu0 0.0
      %1401 = vmatprep.subr.mxu0 0.0
      %1402 = vmatpush2.msra.mxu0 0.0
      %1403 = vmatprep.subr.mxu0 0.0
      %1404 = vmatpush2.msra.mxu0 0.0
      %1405 = vmatprep.subr.mxu0 0.0
      %1406 = vmatpush2.msra.mxu0 0.0
      %1407 = vmatprep.subr.mxu0 0.0
      %1408 = vmatpush2.msra.mxu0 0.0
      %1409 = vmatprep.subr.mxu0 0.0
      %1410 = vmatpush2.msra.mxu0 0.0
      %1411 = vmatprep.subr.mxu0 0.0
      %1412 = vmatpush2.msra.mxu0 0.0
      %1413 = vmatprep.subr.mxu0 0.0
      %1414 = vmatpush2.msra.mxu0 0.0
      %1415 = vmatprep.subr.mxu0 0.0
      %1416 = vmatpush2.msra.mxu0 0.0
      %1417 = vmatprep.subr.mxu0 0.0
      %1418 = vmatpush2.msra.mxu0 0.0
      %1419 = vmatprep.mubr.f32.mxu0 0.0
      %1420 = vmatmul.mubr.f32.gmra.mxu0 %v1305
      %v1421 = vpop.f32.mrf.mxu0
      %v1422 = vadd.f32 0.0, %v1421
      %v1423 = vpop.f32.mrf.mxu0
      %1424 = vmatprep.mubr.f32.mxu0 0.0
      %1425 = vmatmul.mubr.f32.gmra.mxu0 %v1308
      %v1426 = vpop.f32.mrf.mxu0
      %v1427 = vadd.f32 0.0, %v1426
      %v1428 = vpop.f32.mrf.mxu0
      %1429 = vmatprep.mubr.f32.mxu0 0.0
      %1430 = vmatmul.mubr.f32.gmra.mxu0 %v1311
      %v1431 = vpop.f32.mrf.mxu0
      %v1432 = vadd.f32 0.0, %v1431
      %v1433 = vpop.f32.mrf.mxu0
      %1434 = vmatprep.mubr.f32.mxu0 0.0
      %1435 = vmatmul.mubr.f32.gmra.mxu0 %v1314
      %v1436 = vpop.f32.mrf.mxu0
      %v1437 = vadd.f32 0.0, %v1436
      %v1438 = vpop.f32.mrf.mxu0
      %1439 = vmatprep.mubr.f32.mxu0 0.0
      %1440 = vmatmul.mubr.f32.gmra.mxu0 %v1317
      %v1441 = vpop.f32.mrf.mxu0
      %v1442 = vadd.f32 0.0, %v1441
      %v1443 = vpop.f32.mrf.mxu0
      %1444 = vmatprep.mubr.f32.mxu0 0.0
      %1445 = vmatmul.mubr.f32.gmra.mxu0 %v1320
      %v1446 = vpop.f32.mrf.mxu0
      %v1447 = vadd.f32 0.0, %v1446
      %v1448 = vpop.f32.mrf.mxu0
      %1449 = vmatprep.mubr.f32.mxu0 0.0
      %1450 = vmatmul.mubr.f32.gmra.mxu0 %v1323
      %v1451 = vpop.f32.mrf.mxu0
      %v1452 = vadd.f32 0.0, %v1451
      %v1453 = vpop.f32.mrf.mxu0
      %1454 = vmatprep.mubr.f32.mxu0 0.0
      %1455 = vmatmul.mubr.f32.gmra.mxu0 %v1326
      %v1456 = vpop.f32.mrf.mxu0
      %v1457 = vadd.f32 0.0, %v1456
      %v1458 = vpop.f32.mrf.mxu0
      %1459 = vmatprep.mubr.f32.mxu0 0.0
      %1460 = vmatmul.mubr.f32.gmra.mxu0 %v1329
      %v1461 = vpop.f32.mrf.mxu0
      %v1462 = vadd.f32 0.0, %v1461
      %v1463 = vpop.f32.mrf.mxu0
      %1464 = vmatprep.mubr.f32.mxu0 0.0
      %1465 = vmatmul.mubr.f32.gmra.mxu0 %v1332
      %v1466 = vpop.f32.mrf.mxu0
      %v1467 = vadd.f32 0.0, %v1466
      %v1468 = vpop.f32.mrf.mxu0
      %1469 = vmatprep.mubr.f32.mxu0 0.0
      %1470 = vmatmul.mubr.f32.gmra.mxu0 %v1335
      %v1471 = vpop.f32.mrf.mxu0
      %v1472 = vadd.f32 0.0, %v1471
      %v1473 = vpop.f32.mrf.mxu0
      %1474 = vmatprep.mubr.f32.mxu0 0.0
      %1475 = vmatmul.mubr.f32.gmra.mxu0 %v1338
      %v1476 = vpop.f32.mrf.mxu0
      %v1477 = vadd.f32 0.0, %v1476
      %v1478 = vpop.f32.mrf.mxu0
      %1479 = vmatprep.mubr.f32.mxu0 0.0
      %1480 = vmatmul.mubr.f32.gmra.mxu0 %v1341
      %v1481 = vpop.f32.mrf.mxu0
      %v1482 = vadd.f32 0.0, %v1481
      %v1483 = vpop.f32.mrf.mxu0
      %1484 = vmatprep.mubr.f32.mxu0 0.0
      %1485 = vmatmul.mubr.f32.gmra.mxu0 %v1344
      %v1486 = vpop.f32.mrf.mxu0
      %v1487 = vadd.f32 0.0, %v1486
      %v1488 = vpop.f32.mrf.mxu0
      %1489 = vmatprep.mubr.f32.mxu0 0.0
      %1490 = vmatmul.mubr.f32.gmra.mxu0 %v1347
      %v1491 = vpop.f32.mrf.mxu0
      %v1492 = vadd.f32 0.0, %v1491
      %v1493 = vpop.f32.mrf.mxu0
      %1494 = vmatprep.mubr.f32.mxu0 0.0
      %1495 = vmatmul.mubr.f32.gmra.mxu0 %v1350
      %v1496 = vpop.f32.mrf.mxu0
      %v1497 = vadd.f32 0.0, %v1496
      %v1498 = vpop.f32.mrf.mxu0
      %1499 = vdwg.mxu0
      %v1500 = vadd.f32 %v1269, %v1422
      %v1501 = vadd.f32 %v1270, %v1427
      %v1502 = vadd.f32 %v1271, %v1432
      %v1503 = vadd.f32 %v1272, %v1437
      %v1504 = vadd.f32 %v1273, %v1442
      %v1505 = vadd.f32 %v1274, %v1447
      %v1506 = vadd.f32 %v1275, %v1452
      %v1507 = vadd.f32 %v1276, %v1457
      %v1508 = vadd.f32 %v1277, %v1462
      %v1509 = vadd.f32 %v1278, %v1467
      %v1510 = vadd.f32 %v1279, %v1472
      %v1511 = vadd.f32 %v1280, %v1477
      %v1512 = vadd.f32 %v1281, %v1482
      %v1513 = vadd.f32 %v1282, %v1487
      %v1514 = vadd.f32 %v1283, %v1492
      %v1515 = vadd.f32 %v1284, %v1497
      %v1516 = vld [vmem:[%s3] sm:$0x1]
      %v1518 = vlaneseq
      %v1519 = vshrl.u32 %v1518, 7
      %v1520 = vsub.s32 0, %v1519
      %v1521 = vrot.slane %v1516, %v1520
      %v1523 = vadd.f32 %v1500, %v1521
      %v1524 = vadd.f32 %v1501, %v1521
      %v1525 = vadd.f32 %v1502, %v1521
      %v1526 = vadd.f32 %v1503, %v1521
      %v1527 = vadd.f32 %v1504, %v1521
      %v1528 = vadd.f32 %v1505, %v1521
      %v1529 = vadd.f32 %v1506, %v1521
      %v1530 = vadd.f32 %v1507, %v1521
      %v1531 = vadd.f32 %v1508, %v1521
      %v1532 = vadd.f32 %v1509, %v1521
      %v1533 = vadd.f32 %v1510, %v1521
      %v1534 = vadd.f32 %v1511, %v1521
      %v1535 = vadd.f32 %v1512, %v1521
      %v1536 = vadd.f32 %v1513, %v1521
      %v1537 = vadd.f32 %v1514, %v1521
      %v1538 = vadd.f32 %v1515, %v1521
      %vm1539 = vcmp.gt.f32.partialorder %v1523, 0.0
      %vm1540 = vcmp.gt.f32.partialorder %v1524, 0.0
      %vm1541 = vcmp.gt.f32.partialorder %v1525, 0.0
      %vm1542 = vcmp.gt.f32.partialorder %v1526, 0.0
      %vm1543 = vcmp.gt.f32.partialorder %v1527, 0.0
      %vm1544 = vcmp.gt.f32.partialorder %v1528, 0.0
      %vm1545 = vcmp.gt.f32.partialorder %v1529, 0.0
      %vm1546 = vcmp.gt.f32.partialorder %v1530, 0.0
      %vm1547 = vcmp.gt.f32.partialorder %v1531, 0.0
      %vm1548 = vcmp.gt.f32.partialorder %v1532, 0.0
      %vm1549 = vcmp.gt.f32.partialorder %v1533, 0.0
      %vm1550 = vcmp.gt.f32.partialorder %v1534, 0.0
      %vm1551 = vcmp.gt.f32.partialorder %v1535, 0.0
      %vm1552 = vcmp.gt.f32.partialorder %v1536, 0.0
      %vm1553 = vcmp.gt.f32.partialorder %v1537, 0.0
      %vm1554 = vcmp.gt.f32.partialorder %v1538, 0.0
      %v1555 = vmul.f32 %v1523, 1.442695
      %v1556 = vpow.pop %v1555
      %v1557 = vmul.f32 %v1524, 1.442695
      %v1558 = vpow.pop %v1557
      %v1559 = vmul.f32 %v1525, 1.442695
      %v1560 = vpow.pop %v1559
      %v1561 = vmul.f32 %v1526, 1.442695
      %v1562 = vpow.pop %v1561
      %v1563 = vmul.f32 %v1527, 1.442695
      %v1564 = vpow.pop %v1563
      %v1565 = vmul.f32 %v1528, 1.442695
      %v1566 = vpow.pop %v1565
      %v1567 = vmul.f32 %v1529, 1.442695
      %v1568 = vpow.pop %v1567
      %v1569 = vmul.f32 %v1530, 1.442695
      %v1570 = vpow.pop %v1569
      %v1571 = vmul.f32 %v1531, 1.442695
      %v1572 = vpow.pop %v1571
      %v1573 = vmul.f32 %v1532, 1.442695
      %v1574 = vpow.pop %v1573
      %v1575 = vmul.f32 %v1533, 1.442695
      %v1576 = vpow.pop %v1575
      %v1577 = vmul.f32 %v1534, 1.442695
      %v1578 = vpow.pop %v1577
      %v1579 = vmul.f32 %v1535, 1.442695
      %v1580 = vpow.pop %v1579
      %v1581 = vmul.f32 %v1536, 1.442695
      %v1582 = vpow.pop %v1581
      %v1583 = vmul.f32 %v1537, 1.442695
      %v1584 = vpow.pop %v1583
      %v1585 = vmul.f32 %v1538, 1.442695
      %v1586 = vpow.pop %v1585
      %v1587 = vsub.f32 %v1556, 1.0
      %v1588 = vsub.f32 %v1558, 1.0
      %v1589 = vsub.f32 %v1560, 1.0
      %v1590 = vsub.f32 %v1562, 1.0
      %v1591 = vsub.f32 %v1564, 1.0
      %v1592 = vsub.f32 %v1566, 1.0
      %v1593 = vsub.f32 %v1568, 1.0
      %v1594 = vsub.f32 %v1570, 1.0
      %v1595 = vsub.f32 %v1572, 1.0
      %v1596 = vsub.f32 %v1574, 1.0
      %v1597 = vsub.f32 %v1576, 1.0
      %v1598 = vsub.f32 %v1578, 1.0
      %v1599 = vsub.f32 %v1580, 1.0
      %v1600 = vsub.f32 %v1582, 1.0
      %v1601 = vsub.f32 %v1584, 1.0
      %v1602 = vsub.f32 %v1586, 1.0
      %v1603 = vsel %vm1539, %v1523, %v1587
      %v1604 = vsel %vm1540, %v1524, %v1588
      %v1605 = vsel %vm1541, %v1525, %v1589
      %v1606 = vsel %vm1542, %v1526, %v1590
      %v1607 = vsel %vm1543, %v1527, %v1591
      %v1608 = vsel %vm1544, %v1528, %v1592
      %v1609 = vsel %vm1545, %v1529, %v1593
      %v1610 = vsel %vm1546, %v1530, %v1594
      %v1611 = vsel %vm1547, %v1531, %v1595
      %v1612 = vsel %vm1548, %v1532, %v1596
      %v1613 = vsel %vm1549, %v1533, %v1597
      %v1614 = vsel %vm1550, %v1534, %v1598
      %v1615 = vsel %vm1551, %v1535, %v1599
      %v1616 = vsel %vm1552, %v1536, %v1600
      %v1617 = vsel %vm1553, %v1537, %v1601
      %v1618 = vsel %vm1554, %v1538, %v1602
      %1635 = vrot.lane.b32.xlu0 %v1603, 8
      %v1636 = vpop.permute.xlu0 %1635
      %1637 = vrot.lane.b32.xlu0 %v1604, 8
      %v1638 = vpop.permute.xlu0 %1637
      %1639 = vrot.lane.b32.xlu0 %v1605, 8
      %v1640 = vpop.permute.xlu0 %1639
      %1641 = vrot.lane.b32.xlu0 %v1606, 8
      %v1642 = vpop.permute.xlu0 %1641
      %1643 = vrot.lane.b32.xlu0 %v1607, 8
      %v1644 = vpop.permute.xlu0 %1643
      %1645 = vrot.lane.b32.xlu0 %v1608, 8
      %v1646 = vpop.permute.xlu0 %1645
      %1647 = vrot.lane.b32.xlu0 %v1609, 8
      %v1648 = vpop.permute.xlu0 %1647
      %1649 = vrot.lane.b32.xlu0 %v1610, 8
      %v1650 = vpop.permute.xlu0 %1649
      %1651 = vrot.lane.b32.xlu0 %v1611, 8
      %v1652 = vpop.permute.xlu0 %1651
      %1653 = vrot.lane.b32.xlu0 %v1612, 8
      %v1654 = vpop.permute.xlu0 %1653
      %1655 = vrot.lane.b32.xlu0 %v1613, 8
      %v1656 = vpop.permute.xlu0 %1655
      %1657 = vrot.lane.b32.xlu0 %v1614, 8
      %v1658 = vpop.permute.xlu0 %1657
      %1659 = vrot.lane.b32.xlu0 %v1615, 8
      %v1660 = vpop.permute.xlu0 %1659
      %1661 = vrot.lane.b32.xlu0 %v1616, 8
      %v1662 = vpop.permute.xlu0 %1661
      %1663 = vrot.lane.b32.xlu0 %v1617, 8
      %v1664 = vpop.permute.xlu0 %1663
      %1665 = vrot.lane.b32.xlu0 %v1618, 8
      %v1666 = vpop.permute.xlu0 %1665
      %s1683 = scalar_lea.vmem [#allocation3], 24
      %vm1684 = vcmask 130112
      %1685 = vst.msk [vmem:[%s1683] sm:$0xff] %vm1684, %v1636
      %1686 = vst.msk [vmem:[%s1683 + $0x8] sm:$0xff] %vm1684, %v1638
      %1687 = vst.msk [vmem:[%s1683 + $0x10] sm:$0xff] %vm1684, %v1640
      %1688 = vst.msk [vmem:[%s1683 + $0x18] sm:$0xff] %vm1684, %v1642
      %1689 = vst.msk [vmem:[%s1683 + $0x20] sm:$0xff] %vm1684, %v1644
      %1690 = vst.msk [vmem:[%s1683 + $0x28] sm:$0xff] %vm1684, %v1646
      %1691 = vst.msk [vmem:[%s1683 + $0x30] sm:$0xff] %vm1684, %v1648
      %1692 = vst.msk [vmem:[%s1683 + $0x38] sm:$0xff] %vm1684, %v1650
      %1693 = vst.msk [vmem:[%s1683 + $0x40] sm:$0xff] %vm1684, %v1652
      %1694 = vst.msk [vmem:[%s1683 + $0x48] sm:$0xff] %vm1684, %v1654
      %1695 = vst.msk [vmem:[%s1683 + $0x50] sm:$0xff] %vm1684, %v1656
      %1696 = vst.msk [vmem:[%s1683 + $0x58] sm:$0xff] %vm1684, %v1658
      %1697 = vst.msk [vmem:[%s1683 + $0x60] sm:$0xff] %vm1684, %v1660
      %1698 = vst.msk [vmem:[%s1683 + $0x68] sm:$0xff] %vm1684, %v1662
      %1699 = vst.msk [vmem:[%s1683 + $0x70] sm:$0xff] %vm1684, %v1664
      %1700 = vst.msk [vmem:[%s1683 + $0x78] sm:$0xff] %vm1684, %v1666
      %vm1701 = vcmask 63488
      %1702 = vst.msk [vmem:[%s1683 + $0x1] sm:$0x7f] %vm1701, %v1603
      %1703 = vst.msk [vmem:[%s1683 + $0x9] sm:$0x7f] %vm1701, %v1604
      %1704 = vst.msk [vmem:[%s1683 + $0x11] sm:$0x7f] %vm1701, %v1605
      %1705 = vst.msk [vmem:[%s1683 + $0x19] sm:$0x7f] %vm1701, %v1606
      %1706 = vst.msk [vmem:[%s1683 + $0x21] sm:$0x7f] %vm1701, %v1607
      %1707 = vst.msk [vmem:[%s1683 + $0x29] sm:$0x7f] %vm1701, %v1608
      %1708 = vst.msk [vmem:[%s1683 + $0x31] sm:$0x7f] %vm1701, %v1609
      %1709 = vst.msk [vmem:[%s1683 + $0x39] sm:$0x7f] %vm1701, %v1610
      %1710 = vst.msk [vmem:[%s1683 + $0x41] sm:$0x7f] %vm1701, %v1611
      %1711 = vst.msk [vmem:[%s1683 + $0x49] sm:$0x7f] %vm1701, %v1612
      %1712 = vst.msk [vmem:[%s1683 + $0x51] sm:$0x7f] %vm1701, %v1613
      %1713 = vst.msk [vmem:[%s1683 + $0x59] sm:$0x7f] %vm1701, %v1614
      %1714 = vst.msk [vmem:[%s1683 + $0x61] sm:$0x7f] %vm1701, %v1615
      %1715 = vst.msk [vmem:[%s1683 + $0x69] sm:$0x7f] %vm1701, %v1616
      %1716 = vst.msk [vmem:[%s1683 + $0x71] sm:$0x7f] %vm1701, %v1617
      %1717 = vst.msk [vmem:[%s1683 + $0x79] sm:$0x7f] %vm1701, %v1618
      %1718 = vrot.lane.b32.xlu0 %v1603, 16
      %v1719 = vpop.permute.xlu0 %1718
      %1720 = vrot.lane.b32.xlu0 %v1604, 16
      %v1721 = vpop.permute.xlu0 %1720
      %1722 = vrot.lane.b32.xlu0 %v1605, 16
      %v1723 = vpop.permute.xlu0 %1722
      %1724 = vrot.lane.b32.xlu0 %v1606, 16
      %v1725 = vpop.permute.xlu0 %1724
      %1726 = vrot.lane.b32.xlu0 %v1607, 16
      %v1727 = vpop.permute.xlu0 %1726
      %1728 = vrot.lane.b32.xlu0 %v1608, 16
      %v1729 = vpop.permute.xlu0 %1728
      %1730 = vrot.lane.b32.xlu0 %v1609, 16
      %v1731 = vpop.permute.xlu0 %1730
      %1732 = vrot.lane.b32.xlu0 %v1610, 16
      %v1733 = vpop.permute.xlu0 %1732
      %1734 = vrot.lane.b32.xlu0 %v1611, 16
      %v1735 = vpop.permute.xlu0 %1734
      %1736 = vrot.lane.b32.xlu0 %v1612, 16
      %v1737 = vpop.permute.xlu0 %1736
      %1738 = vrot.lane.b32.xlu0 %v1613, 16
      %v1739 = vpop.permute.xlu0 %1738
      %1740 = vrot.lane.b32.xlu0 %v1614, 16
      %v1741 = vpop.permute.xlu0 %1740
      %1742 = vrot.lane.b32.xlu0 %v1615, 16
      %v1743 = vpop.permute.xlu0 %1742
      %1744 = vrot.lane.b32.xlu0 %v1616, 16
      %v1745 = vpop.permute.xlu0 %1744
      %1746 = vrot.lane.b32.xlu0 %v1617, 16
      %v1747 = vpop.permute.xlu0 %1746
      %1748 = vrot.lane.b32.xlu0 %v1618, 16
      %v1749 = vpop.permute.xlu0 %1748
      %vm1766 = vcmask 195713
      %1767 = vst.msk [vmem:[%s1683 - $0x1] sm:$0xfe] %vm1766, %v1719
      %1768 = vst.msk [vmem:[%s1683 + $0x7] sm:$0xfe] %vm1766, %v1721
      %1769 = vst.msk [vmem:[%s1683 + $0xf] sm:$0xfe] %vm1766, %v1723
      %1770 = vst.msk [vmem:[%s1683 + $0x17] sm:$0xfe] %vm1766, %v1725
      %1771 = vst.msk [vmem:[%s1683 + $0x1f] sm:$0xfe] %vm1766, %v1727
      %1772 = vst.msk [vmem:[%s1683 + $0x27] sm:$0xfe] %vm1766, %v1729
      %1773 = vst.msk [vmem:[%s1683 + $0x2f] sm:$0xfe] %vm1766, %v1731
      %1774 = vst.msk [vmem:[%s1683 + $0x37] sm:$0xfe] %vm1766, %v1733
      %1775 = vst.msk [vmem:[%s1683 + $0x3f] sm:$0xfe] %vm1766, %v1735
      %1776 = vst.msk [vmem:[%s1683 + $0x47] sm:$0xfe] %vm1766, %v1737
      %1777 = vst.msk [vmem:[%s1683 + $0x4f] sm:$0xfe] %vm1766, %v1739
      %1778 = vst.msk [vmem:[%s1683 + $0x57] sm:$0xfe] %vm1766, %v1741
      %1779 = vst.msk [vmem:[%s1683 + $0x5f] sm:$0xfe] %vm1766, %v1743
      %1780 = vst.msk [vmem:[%s1683 + $0x67] sm:$0xfe] %vm1766, %v1745
      %1781 = vst.msk [vmem:[%s1683 + $0x6f] sm:$0xfe] %vm1766, %v1747
      %1782 = vst.msk [vmem:[%s1683 + $0x77] sm:$0xfe] %vm1766, %v1749
      %v1783 = vld [vmem:[#allocation3] sm:$0xff]
      %v1784 = vld [vmem:[#allocation3 + $0x8] sm:$0xff]
      %v1785 = vld [vmem:[#allocation3 + $0x10] sm:$0xff]
      %v1786 = vld [vmem:[#allocation3 + $0x18] sm:$0xff]
      %v1787 = vld [vmem:[#allocation3 + $0x20] sm:$0xff]
      %v1788 = vld [vmem:[#allocation3 + $0x28] sm:$0xff]
      %v1789 = vld [vmem:[#allocation3 + $0x30] sm:$0xff]
      %v1790 = vld [vmem:[#allocation3 + $0x38] sm:$0xff]
      %v1791 = vld [vmem:[#allocation3 + $0x40] sm:$0xff]
      %v1792 = vld [vmem:[#allocation3 + $0x48] sm:$0xff]
      %v1793 = vld [vmem:[#allocation3 + $0x50] sm:$0xff]
      %v1794 = vld [vmem:[#allocation3 + $0x58] sm:$0xff]
      %v1795 = vld [vmem:[#allocation3 + $0x60] sm:$0xff]
      %v1796 = vld [vmem:[#allocation3 + $0x68] sm:$0xff]
      %v1797 = vld [vmem:[#allocation3 + $0x70] sm:$0xff]
      %v1798 = vld [vmem:[#allocation3 + $0x78] sm:$0xff]
      %v1799 = vld [vmem:[%s4] sm:$0xff]
      %v1800 = vld [vmem:[%s4 + $0x8] sm:$0xff]
      %v1801 = vld [vmem:[%s4 + $0x10] sm:$0xff]
      %s1802 = scalar_lea.vmem [#allocation3], 8
      %v1803 = vld [vmem:[%s1802] sm:$0xff]
      %v1804 = vld [vmem:[%s1802 + $0x8] sm:$0xff]
      %v1805 = vld [vmem:[%s1802 + $0x10] sm:$0xff]
      %v1806 = vld [vmem:[%s1802 + $0x18] sm:$0xff]
      %v1807 = vld [vmem:[%s1802 + $0x20] sm:$0xff]
      %v1808 = vld [vmem:[%s1802 + $0x28] sm:$0xff]
      %v1809 = vld [vmem:[%s1802 + $0x30] sm:$0xff]
      %v1810 = vld [vmem:[%s1802 + $0x38] sm:$0xff]
      %v1811 = vld [vmem:[%s1802 + $0x40] sm:$0xff]
      %v1812 = vld [vmem:[%s1802 + $0x48] sm:$0xff]
      %v1813 = vld [vmem:[%s1802 + $0x50] sm:$0xff]
      %v1814 = vld [vmem:[%s1802 + $0x58] sm:$0xff]
      %v1815 = vld [vmem:[%s1802 + $0x60] sm:$0xff]
      %v1816 = vld [vmem:[%s1802 + $0x68] sm:$0xff]
      %v1817 = vld [vmem:[%s1802 + $0x70] sm:$0xff]
      %v1818 = vld [vmem:[%s1802 + $0x78] sm:$0xff]
      %s1819 = scalar_lea.vmem %s4, 24
      %v1820 = vld [vmem:[%s1819] sm:$0xff]
      %v1821 = vld [vmem:[%s1819 + $0x8] sm:$0xff]
      %v1822 = vld [vmem:[%s1819 + $0x10] sm:$0xff]
      %vm1823 = vcmask 195584
      %v1825 = vsel %vm1823, %v1803, 0
      %v1828 = vsel %vm1823, %v1804, 0
      %v1831 = vsel %vm1823, %v1805, 0
      %v1834 = vsel %vm1823, %v1806, 0
      %v1837 = vsel %vm1823, %v1807, 0
      %v1840 = vsel %vm1823, %v1808, 0
      %v1843 = vsel %vm1823, %v1809, 0
      %v1846 = vsel %vm1823, %v1810, 0
      %v1849 = vsel %vm1823, %v1811, 0
      %v1852 = vsel %vm1823, %v1812, 0
      %v1855 = vsel %vm1823, %v1813, 0
      %v1858 = vsel %vm1823, %v1814, 0
      %v1861 = vsel %vm1823, %v1815, 0
      %v1864 = vsel %vm1823, %v1816, 0
      %v1867 = vsel %vm1823, %v1817, 0
      %v1870 = vsel %vm1823, %v1818, 0
      %1872 = vmatprep.subr.mxu0 0.0
      %1873 = vmatpush1.msra.mxu0 0.0
      %1874 = vmatprep.subr.mxu0 0.0
      %1875 = vmatpush1.msra.mxu0 0.0
      %1876 = vmatprep.subr.mxu0 0.0
      %1877 = vmatpush1.msra.mxu0 0.0
      %1878 = vmatprep.subr.mxu0 0.0
      %1879 = vmatpush1.msra.mxu0 0.0
      %1880 = vmatprep.subr.mxu0 0.0
      %1881 = vmatpush1.msra.mxu0 0.0
      %1882 = vmatprep.subr.mxu0 0.0
      %1883 = vmatpush1.msra.mxu0 0.0
      %1884 = vmatprep.subr.mxu0 0.0
      %1885 = vmatpush1.msra.mxu0 0.0
      %1886 = vmatprep.subr.mxu0 0.0
      %1887 = vmatpush1.msra.mxu0 0.0
      %1888 = vmatprep.subr.mxu0 0.0
      %1889 = vmatpush1.msra.mxu0 0.0
      %1890 = vmatprep.subr.mxu0 0.0
      %1891 = vmatpush1.msra.mxu0 0.0
      %1892 = vmatprep.subr.mxu0 0.0
      %1893 = vmatpush1.msra.mxu0 0.0
      %1894 = vmatprep.subr.mxu0 0.0
      %1895 = vmatpush1.msra.mxu0 0.0
      %1896 = vmatprep.subr.mxu0 0.0
      %1897 = vmatpush1.msra.mxu0 0.0
      %1898 = vmatprep.subr.mxu0 0.0
      %1899 = vmatpush1.msra.mxu0 %v1822
      %1900 = vmatprep.subr.mxu0 0.0
      %1901 = vmatpush1.msra.mxu0 %v1821
      %1902 = vmatprep.subr.mxu0 0.0
      %1903 = vmatpush1.msra.mxu0 %v1820
      %1904 = vmatprep.subr.mxu0 0.0
      %1905 = vmatpush2.msra.mxu0 0.0
      %1906 = vmatprep.subr.mxu0 0.0
      %1907 = vmatpush2.msra.mxu0 0.0
      %1908 = vmatprep.subr.mxu0 0.0
      %1909 = vmatpush2.msra.mxu0 0.0
      %1910 = vmatprep.subr.mxu0 0.0
      %1911 = vmatpush2.msra.mxu0 0.0
      %1912 = vmatprep.subr.mxu0 0.0
      %1913 = vmatpush2.msra.mxu0 0.0
      %1914 = vmatprep.subr.mxu0 0.0
      %1915 = vmatpush2.msra.mxu0 0.0
      %1916 = vmatprep.subr.mxu0 0.0
      %1917 = vmatpush2.msra.mxu0 0.0
      %1918 = vmatprep.subr.mxu0 0.0
      %1919 = vmatpush2.msra.mxu0 0.0
      %1920 = vmatprep.subr.mxu0 0.0
      %1921 = vmatpush2.msra.mxu0 0.0
      %1922 = vmatprep.subr.mxu0 0.0
      %1923 = vmatpush2.msra.mxu0 0.0
      %1924 = vmatprep.subr.mxu0 0.0
      %1925 = vmatpush2.msra.mxu0 0.0
      %1926 = vmatprep.subr.mxu0 0.0
      %1927 = vmatpush2.msra.mxu0 0.0
      %1928 = vmatprep.subr.mxu0 0.0
      %1929 = vmatpush2.msra.mxu0 0.0
      %1930 = vmatprep.subr.mxu0 0.0
      %1931 = vmatpush2.msra.mxu0 0.0
      %1932 = vmatprep.subr.mxu0 0.0
      %1933 = vmatpush2.msra.mxu0 0.0
      %1934 = vmatprep.subr.mxu0 0.0
      %1935 = vmatpush2.msra.mxu0 0.0
      %1936 = vmatprep.mubr.f32.mxu0 0.0
      %1937 = vmatmul.mubr.f32.gmra.mxu0 %v1825
      %v1938 = vpop.f32.mrf.mxu0
      %v1939 = vadd.f32 0.0, %v1938
      %v1940 = vpop.f32.mrf.mxu0
      %1941 = vmatprep.mubr.f32.mxu0 0.0
      %1942 = vmatmul.mubr.f32.gmra.mxu0 %v1828
      %v1943 = vpop.f32.mrf.mxu0
      %v1944 = vadd.f32 0.0, %v1943
      %v1945 = vpop.f32.mrf.mxu0
      %1946 = vmatprep.mubr.f32.mxu0 0.0
      %1947 = vmatmul.mubr.f32.gmra.mxu0 %v1831
      %v1948 = vpop.f32.mrf.mxu0
      %v1949 = vadd.f32 0.0, %v1948
      %v1950 = vpop.f32.mrf.mxu0
      %1951 = vmatprep.mubr.f32.mxu0 0.0
      %1952 = vmatmul.mubr.f32.gmra.mxu0 %v1834
      %v1953 = vpop.f32.mrf.mxu0
      %v1954 = vadd.f32 0.0, %v1953
      %v1955 = vpop.f32.mrf.mxu0
      %1956 = vmatprep.mubr.f32.mxu0 0.0
      %1957 = vmatmul.mubr.f32.gmra.mxu0 %v1837
      %v1958 = vpop.f32.mrf.mxu0
      %v1959 = vadd.f32 0.0, %v1958
      %v1960 = vpop.f32.mrf.mxu0
      %1961 = vmatprep.mubr.f32.mxu0 0.0
      %1962 = vmatmul.mubr.f32.gmra.mxu0 %v1840
      %v1963 = vpop.f32.mrf.mxu0
      %v1964 = vadd.f32 0.0, %v1963
      %v1965 = vpop.f32.mrf.mxu0
      %1966 = vmatprep.mubr.f32.mxu0 0.0
      %1967 = vmatmul.mubr.f32.gmra.mxu0 %v1843
      %v1968 = vpop.f32.mrf.mxu0
      %v1969 = vadd.f32 0.0, %v1968
      %v1970 = vpop.f32.mrf.mxu0
      %1971 = vmatprep.mubr.f32.mxu0 0.0
      %1972 = vmatmul.mubr.f32.gmra.mxu0 %v1846
      %v1973 = vpop.f32.mrf.mxu0
      %v1974 = vadd.f32 0.0, %v1973
      %v1975 = vpop.f32.mrf.mxu0
      %1976 = vmatprep.mubr.f32.mxu0 0.0
      %1977 = vmatmul.mubr.f32.gmra.mxu0 %v1849
      %v1978 = vpop.f32.mrf.mxu0
      %v1979 = vadd.f32 0.0, %v1978
      %v1980 = vpop.f32.mrf.mxu0
      %1981 = vmatprep.mubr.f32.mxu0 0.0
      %1982 = vmatmul.mubr.f32.gmra.mxu0 %v1852
      %v1983 = vpop.f32.mrf.mxu0
      %v1984 = vadd.f32 0.0, %v1983
      %v1985 = vpop.f32.mrf.mxu0
      %1986 = vmatprep.mubr.f32.mxu0 0.0
      %1987 = vmatmul.mubr.f32.gmra.mxu0 %v1855
      %v1988 = vpop.f32.mrf.mxu0
      %v1989 = vadd.f32 0.0, %v1988
      %v1990 = vpop.f32.mrf.mxu0
      %1991 = vmatprep.mubr.f32.mxu0 0.0
      %1992 = vmatmul.mubr.f32.gmra.mxu0 %v1858
      %v1993 = vpop.f32.mrf.mxu0
      %v1994 = vadd.f32 0.0, %v1993
      %v1995 = vpop.f32.mrf.mxu0
      %1996 = vmatprep.mubr.f32.mxu0 0.0
      %1997 = vmatmul.mubr.f32.gmra.mxu0 %v1861
      %v1998 = vpop.f32.mrf.mxu0
      %v1999 = vadd.f32 0.0, %v1998
      %v2000 = vpop.f32.mrf.mxu0
      %2001 = vmatprep.mubr.f32.mxu0 0.0
      %2002 = vmatmul.mubr.f32.gmra.mxu0 %v1864
      %v2003 = vpop.f32.mrf.mxu0
      %v2004 = vadd.f32 0.0, %v2003
      %v2005 = vpop.f32.mrf.mxu0
      %2006 = vmatprep.mubr.f32.mxu0 0.0
      %2007 = vmatmul.mubr.f32.gmra.mxu0 %v1867
      %v2008 = vpop.f32.mrf.mxu0
      %v2009 = vadd.f32 0.0, %v2008
      %v2010 = vpop.f32.mrf.mxu0
      %2011 = vmatprep.mubr.f32.mxu0 0.0
      %2012 = vmatmul.mubr.f32.gmra.mxu0 %v1870
      %v2013 = vpop.f32.mrf.mxu0
      %v2014 = vadd.f32 0.0, %v2013
      %v2015 = vpop.f32.mrf.mxu0
      %2016 = vdwg.mxu0
      %v2018 = vsel %vm1823, %v1783, 0
      %v2021 = vsel %vm1823, %v1784, 0
      %v2024 = vsel %vm1823, %v1785, 0
      %v2027 = vsel %vm1823, %v1786, 0
      %v2030 = vsel %vm1823, %v1787, 0
      %v2033 = vsel %vm1823, %v1788, 0
      %v2036 = vsel %vm1823, %v1789, 0
      %v2039 = vsel %vm1823, %v1790, 0
      %v2042 = vsel %vm1823, %v1791, 0
      %v2045 = vsel %vm1823, %v1792, 0
      %v2048 = vsel %vm1823, %v1793, 0
      %v2051 = vsel %vm1823, %v1794, 0
      %v2054 = vsel %vm1823, %v1795, 0
      %v2057 = vsel %vm1823, %v1796, 0
      %v2060 = vsel %vm1823, %v1797, 0
      %v2063 = vsel %vm1823, %v1798, 0
      %2065 = vmatprep.subr.mxu0 0.0
      %2066 = vmatpush1.msra.mxu0 0.0
      %2067 = vmatprep.subr.mxu0 0.0
      %2068 = vmatpush1.msra.mxu0 0.0
      %2069 = vmatprep.subr.mxu0 0.0
      %2070 = vmatpush1.msra.mxu0 0.0
      %2071 = vmatprep.subr.mxu0 0.0
      %2072 = vmatpush1.msra.mxu0 0.0
      %2073 = vmatprep.subr.mxu0 0.0
      %2074 = vmatpush1.msra.mxu0 0.0
      %2075 = vmatprep.subr.mxu0 0.0
      %2076 = vmatpush1.msra.mxu0 0.0
      %2077 = vmatprep.subr.mxu0 0.0
      %2078 = vmatpush1.msra.mxu0 0.0
      %2079 = vmatprep.subr.mxu0 0.0
      %2080 = vmatpush1.msra.mxu0 0.0
      %2081 = vmatprep.subr.mxu0 0.0
      %2082 = vmatpush1.msra.mxu0 0.0
      %2083 = vmatprep.subr.mxu0 0.0
      %2084 = vmatpush1.msra.mxu0 0.0
      %2085 = vmatprep.subr.mxu0 0.0
      %2086 = vmatpush1.msra.mxu0 0.0
      %2087 = vmatprep.subr.mxu0 0.0
      %2088 = vmatpush1.msra.mxu0 0.0
      %2089 = vmatprep.subr.mxu0 0.0
      %2090 = vmatpush1.msra.mxu0 0.0
      %2091 = vmatprep.subr.mxu0 0.0
      %2092 = vmatpush1.msra.mxu0 %v1801
      %2093 = vmatprep.subr.mxu0 0.0
      %2094 = vmatpush1.msra.mxu0 %v1800
      %2095 = vmatprep.subr.mxu0 0.0
      %2096 = vmatpush1.msra.mxu0 %v1799
      %2097 = vmatprep.subr.mxu0 0.0
      %2098 = vmatpush2.msra.mxu0 0.0
      %2099 = vmatprep.subr.mxu0 0.0
      %2100 = vmatpush2.msra.mxu0 0.0
      %2101 = vmatprep.subr.mxu0 0.0
      %2102 = vmatpush2.msra.mxu0 0.0
      %2103 = vmatprep.subr.mxu0 0.0
      %2104 = vmatpush2.msra.mxu0 0.0
      %2105 = vmatprep.subr.mxu0 0.0
      %2106 = vmatpush2.msra.mxu0 0.0
      %2107 = vmatprep.subr.mxu0 0.0
      %2108 = vmatpush2.msra.mxu0 0.0
      %2109 = vmatprep.subr.mxu0 0.0
      %2110 = vmatpush2.msra.mxu0 0.0
      %2111 = vmatprep.subr.mxu0 0.0
      %2112 = vmatpush2.msra.mxu0 0.0
      %2113 = vmatprep.subr.mxu0 0.0
      %2114 = vmatpush2.msra.mxu0 0.0
      %2115 = vmatprep.subr.mxu0 0.0
      %2116 = vmatpush2.msra.mxu0 0.0
      %2117 = vmatprep.subr.mxu0 0.0
      %2118 = vmatpush2.msra.mxu0 0.0
      %2119 = vmatprep.subr.mxu0 0.0
      %2120 = vmatpush2.msra.mxu0 0.0
      %2121 = vmatprep.subr.mxu0 0.0
      %2122 = vmatpush2.msra.mxu0 0.0
      %2123 = vmatprep.subr.mxu0 0.0
      %2124 = vmatpush2.msra.mxu0 0.0
      %2125 = vmatprep.subr.mxu0 0.0
      %2126 = vmatpush2.msra.mxu0 0.0
      %2127 = vmatprep.subr.mxu0 0.0
      %2128 = vmatpush2.msra.mxu0 0.0
      %2129 = vmatprep.mubr.f32.mxu0 0.0
      %2130 = vmatmul.mubr.f32.gmra.mxu0 %v2018
      %v2131 = vpop.f32.mrf.mxu0
      %v2132 = vadd.f32 %v1939, %v2131
      %v2133 = vpop.f32.mrf.mxu0
      %2134 = vmatprep.mubr.f32.mxu0 0.0
      %2135 = vmatmul.mubr.f32.gmra.mxu0 %v2021
      %v2136 = vpop.f32.mrf.mxu0
      %v2137 = vadd.f32 %v1944, %v2136
      %v2138 = vpop.f32.mrf.mxu0
      %2139 = vmatprep.mubr.f32.mxu0 0.0
      %2140 = vmatmul.mubr.f32.gmra.mxu0 %v2024
      %v2141 = vpop.f32.mrf.mxu0
      %v2142 = vadd.f32 %v1949, %v2141
      %v2143 = vpop.f32.mrf.mxu0
      %2144 = vmatprep.mubr.f32.mxu0 0.0
      %2145 = vmatmul.mubr.f32.gmra.mxu0 %v2027
      %v2146 = vpop.f32.mrf.mxu0
      %v2147 = vadd.f32 %v1954, %v2146
      %v2148 = vpop.f32.mrf.mxu0
      %2149 = vmatprep.mubr.f32.mxu0 0.0
      %2150 = vmatmul.mubr.f32.gmra.mxu0 %v2030
      %v2151 = vpop.f32.mrf.mxu0
      %v2152 = vadd.f32 %v1959, %v2151
      %v2153 = vpop.f32.mrf.mxu0
      %2154 = vmatprep.mubr.f32.mxu0 0.0
      %2155 = vmatmul.mubr.f32.gmra.mxu0 %v2033
      %v2156 = vpop.f32.mrf.mxu0
      %v2157 = vadd.f32 %v1964, %v2156
      %v2158 = vpop.f32.mrf.mxu0
      %2159 = vmatprep.mubr.f32.mxu0 0.0
      %2160 = vmatmul.mubr.f32.gmra.mxu0 %v2036
      %v2161 = vpop.f32.mrf.mxu0
      %v2162 = vadd.f32 %v1969, %v2161
      %v2163 = vpop.f32.mrf.mxu0
      %2164 = vmatprep.mubr.f32.mxu0 0.0
      %2165 = vmatmul.mubr.f32.gmra.mxu0 %v2039
      %v2166 = vpop.f32.mrf.mxu0
      %v2167 = vadd.f32 %v1974, %v2166
      %v2168 = vpop.f32.mrf.mxu0
      %2169 = vmatprep.mubr.f32.mxu0 0.0
      %2170 = vmatmul.mubr.f32.gmra.mxu0 %v2042
      %v2171 = vpop.f32.mrf.mxu0
      %v2172 = vadd.f32 %v1979, %v2171
      %v2173 = vpop.f32.mrf.mxu0
      %2174 = vmatprep.mubr.f32.mxu0 0.0
      %2175 = vmatmul.mubr.f32.gmra.mxu0 %v2045
      %v2176 = vpop.f32.mrf.mxu0
      %v2177 = vadd.f32 %v1984, %v2176
      %v2178 = vpop.f32.mrf.mxu0
      %2179 = vmatprep.mubr.f32.mxu0 0.0
      %2180 = vmatmul.mubr.f32.gmra.mxu0 %v2048
      %v2181 = vpop.f32.mrf.mxu0
      %v2182 = vadd.f32 %v1989, %v2181
      %v2183 = vpop.f32.mrf.mxu0
      %2184 = vmatprep.mubr.f32.mxu0 0.0
      %2185 = vmatmul.mubr.f32.gmra.mxu0 %v2051
      %v2186 = vpop.f32.mrf.mxu0
      %v2187 = vadd.f32 %v1994, %v2186
      %v2188 = vpop.f32.mrf.mxu0
      %2189 = vmatprep.mubr.f32.mxu0 0.0
      %2190 = vmatmul.mubr.f32.gmra.mxu0 %v2054
      %v2191 = vpop.f32.mrf.mxu0
      %v2192 = vadd.f32 %v1999, %v2191
      %v2193 = vpop.f32.mrf.mxu0
      %2194 = vmatprep.mubr.f32.mxu0 0.0
      %2195 = vmatmul.mubr.f32.gmra.mxu0 %v2057
      %v2196 = vpop.f32.mrf.mxu0
      %v2197 = vadd.f32 %v2004, %v2196
      %v2198 = vpop.f32.mrf.mxu0
      %2199 = vmatprep.mubr.f32.mxu0 0.0
      %2200 = vmatmul.mubr.f32.gmra.mxu0 %v2060
      %v2201 = vpop.f32.mrf.mxu0
      %v2202 = vadd.f32 %v2009, %v2201
      %v2203 = vpop.f32.mrf.mxu0
      %2204 = vmatprep.mubr.f32.mxu0 0.0
      %2205 = vmatmul.mubr.f32.gmra.mxu0 %v2063
      %v2206 = vpop.f32.mrf.mxu0
      %v2207 = vadd.f32 %v2014, %v2206
      %v2208 = vpop.f32.mrf.mxu0
      %2209 = vdwg.mxu0
      %s2210 = scalar_lea.vmem [#allocation3], 16
      %v2211 = vld [vmem:[%s2210] sm:$0xff]
      %v2212 = vld [vmem:[%s2210 + $0x8] sm:$0xff]
      %v2213 = vld [vmem:[%s2210 + $0x10] sm:$0xff]
      %v2214 = vld [vmem:[%s2210 + $0x18] sm:$0xff]
      %v2215 = vld [vmem:[%s2210 + $0x20] sm:$0xff]
      %v2216 = vld [vmem:[%s2210 + $0x28] sm:$0xff]
      %v2217 = vld [vmem:[%s2210 + $0x30] sm:$0xff]
      %v2218 = vld [vmem:[%s2210 + $0x38] sm:$0xff]
      %v2219 = vld [vmem:[%s2210 + $0x40] sm:$0xff]
      %v2220 = vld [vmem:[%s2210 + $0x48] sm:$0xff]
      %v2221 = vld [vmem:[%s2210 + $0x50] sm:$0xff]
      %v2222 = vld [vmem:[%s2210 + $0x58] sm:$0xff]
      %v2223 = vld [vmem:[%s2210 + $0x60] sm:$0xff]
      %v2224 = vld [vmem:[%s2210 + $0x68] sm:$0xff]
      %v2225 = vld [vmem:[%s2210 + $0x70] sm:$0xff]
      %v2226 = vld [vmem:[%s2210 + $0x78] sm:$0xff]
      %s2227 = scalar_lea.vmem %s4, 48
      %v2228 = vld [vmem:[%s2227] sm:$0xff]
      %v2229 = vld [vmem:[%s2227 + $0x8] sm:$0xff]
      %v2230 = vld [vmem:[%s2227 + $0x10] sm:$0xff]
      %v2232 = vsel %vm1823, %v2211, 0
      %v2235 = vsel %vm1823, %v2212, 0
      %v2238 = vsel %vm1823, %v2213, 0
      %v2241 = vsel %vm1823, %v2214, 0
      %v2244 = vsel %vm1823, %v2215, 0
      %v2247 = vsel %vm1823, %v2216, 0
      %v2250 = vsel %vm1823, %v2217, 0
      %v2253 = vsel %vm1823, %v2218, 0
      %v2256 = vsel %vm1823, %v2219, 0
      %v2259 = vsel %vm1823, %v2220, 0
      %v2262 = vsel %vm1823, %v2221, 0
      %v2265 = vsel %vm1823, %v2222, 0
      %v2268 = vsel %vm1823, %v2223, 0
      %v2271 = vsel %vm1823, %v2224, 0
      %v2274 = vsel %vm1823, %v2225, 0
      %v2277 = vsel %vm1823, %v2226, 0
      %2279 = vmatprep.subr.mxu0 0.0
      %2280 = vmatpush1.msra.mxu0 0.0
      %2281 = vmatprep.subr.mxu0 0.0
      %2282 = vmatpush1.msra.mxu0 0.0
      %2283 = vmatprep.subr.mxu0 0.0
      %2284 = vmatpush1.msra.mxu0 0.0
      %2285 = vmatprep.subr.mxu0 0.0
      %2286 = vmatpush1.msra.mxu0 0.0
      %2287 = vmatprep.subr.mxu0 0.0
      %2288 = vmatpush1.msra.mxu0 0.0
      %2289 = vmatprep.subr.mxu0 0.0
      %2290 = vmatpush1.msra.mxu0 0.0
      %2291 = vmatprep.subr.mxu0 0.0
      %2292 = vmatpush1.msra.mxu0 0.0
      %2293 = vmatprep.subr.mxu0 0.0
      %2294 = vmatpush1.msra.mxu0 0.0
      %2295 = vmatprep.subr.mxu0 0.0
      %2296 = vmatpush1.msra.mxu0 0.0
      %2297 = vmatprep.subr.mxu0 0.0
      %2298 = vmatpush1.msra.mxu0 0.0
      %2299 = vmatprep.subr.mxu0 0.0
      %2300 = vmatpush1.msra.mxu0 0.0
      %2301 = vmatprep.subr.mxu0 0.0
      %2302 = vmatpush1.msra.mxu0 0.0
      %2303 = vmatprep.subr.mxu0 0.0
      %2304 = vmatpush1.msra.mxu0 0.0
      %2305 = vmatprep.subr.mxu0 0.0
      %2306 = vmatpush1.msra.mxu0 %v2230
      %2307 = vmatprep.subr.mxu0 0.0
      %2308 = vmatpush1.msra.mxu0 %v2229
      %2309 = vmatprep.subr.mxu0 0.0
      %2310 = vmatpush1.msra.mxu0 %v2228
      %2311 = vmatprep.subr.mxu0 0.0
      %2312 = vmatpush2.msra.mxu0 0.0
      %2313 = vmatprep.subr.mxu0 0.0
      %2314 = vmatpush2.msra.mxu0 0.0
      %2315 = vmatprep.subr.mxu0 0.0
      %2316 = vmatpush2.msra.mxu0 0.0
      %2317 = vmatprep.subr.mxu0 0.0
      %2318 = vmatpush2.msra.mxu0 0.0
      %2319 = vmatprep.subr.mxu0 0.0
      %2320 = vmatpush2.msra.mxu0 0.0
      %2321 = vmatprep.subr.mxu0 0.0
      %2322 = vmatpush2.msra.mxu0 0.0
      %2323 = vmatprep.subr.mxu0 0.0
      %2324 = vmatpush2.msra.mxu0 0.0
      %2325 = vmatprep.subr.mxu0 0.0
      %2326 = vmatpush2.msra.mxu0 0.0
      %2327 = vmatprep.subr.mxu0 0.0
      %2328 = vmatpush2.msra.mxu0 0.0
      %2329 = vmatprep.subr.mxu0 0.0
      %2330 = vmatpush2.msra.mxu0 0.0
      %2331 = vmatprep.subr.mxu0 0.0
      %2332 = vmatpush2.msra.mxu0 0.0
      %2333 = vmatprep.subr.mxu0 0.0
      %2334 = vmatpush2.msra.mxu0 0.0
      %2335 = vmatprep.subr.mxu0 0.0
      %2336 = vmatpush2.msra.mxu0 0.0
      %2337 = vmatprep.subr.mxu0 0.0
      %2338 = vmatpush2.msra.mxu0 0.0
      %2339 = vmatprep.subr.mxu0 0.0
      %2340 = vmatpush2.msra.mxu0 0.0
      %2341 = vmatprep.subr.mxu0 0.0
      %2342 = vmatpush2.msra.mxu0 0.0
      %2343 = vmatprep.mubr.f32.mxu0 0.0
      %2344 = vmatmul.mubr.f32.gmra.mxu0 %v2232
      %v2345 = vpop.f32.mrf.mxu0
      %v2346 = vadd.f32 0.0, %v2345
      %v2347 = vpop.f32.mrf.mxu0
      %2348 = vmatprep.mubr.f32.mxu0 0.0
      %2349 = vmatmul.mubr.f32.gmra.mxu0 %v2235
      %v2350 = vpop.f32.mrf.mxu0
      %v2351 = vadd.f32 0.0, %v2350
      %v2352 = vpop.f32.mrf.mxu0
      %2353 = vmatprep.mubr.f32.mxu0 0.0
      %2354 = vmatmul.mubr.f32.gmra.mxu0 %v2238
      %v2355 = vpop.f32.mrf.mxu0
      %v2356 = vadd.f32 0.0, %v2355
      %v2357 = vpop.f32.mrf.mxu0
      %2358 = vmatprep.mubr.f32.mxu0 0.0
      %2359 = vmatmul.mubr.f32.gmra.mxu0 %v2241
      %v2360 = vpop.f32.mrf.mxu0
      %v2361 = vadd.f32 0.0, %v2360
      %v2362 = vpop.f32.mrf.mxu0
      %2363 = vmatprep.mubr.f32.mxu0 0.0
      %2364 = vmatmul.mubr.f32.gmra.mxu0 %v2244
      %v2365 = vpop.f32.mrf.mxu0
      %v2366 = vadd.f32 0.0, %v2365
      %v2367 = vpop.f32.mrf.mxu0
      %2368 = vmatprep.mubr.f32.mxu0 0.0
      %2369 = vmatmul.mubr.f32.gmra.mxu0 %v2247
      %v2370 = vpop.f32.mrf.mxu0
      %v2371 = vadd.f32 0.0, %v2370
      %v2372 = vpop.f32.mrf.mxu0
      %2373 = vmatprep.mubr.f32.mxu0 0.0
      %2374 = vmatmul.mubr.f32.gmra.mxu0 %v2250
      %v2375 = vpop.f32.mrf.mxu0
      %v2376 = vadd.f32 0.0, %v2375
      %v2377 = vpop.f32.mrf.mxu0
      %2378 = vmatprep.mubr.f32.mxu0 0.0
      %2379 = vmatmul.mubr.f32.gmra.mxu0 %v2253
      %v2380 = vpop.f32.mrf.mxu0
      %v2381 = vadd.f32 0.0, %v2380
      %v2382 = vpop.f32.mrf.mxu0
      %2383 = vmatprep.mubr.f32.mxu0 0.0
      %2384 = vmatmul.mubr.f32.gmra.mxu0 %v2256
      %v2385 = vpop.f32.mrf.mxu0
      %v2386 = vadd.f32 0.0, %v2385
      %v2387 = vpop.f32.mrf.mxu0
      %2388 = vmatprep.mubr.f32.mxu0 0.0
      %2389 = vmatmul.mubr.f32.gmra.mxu0 %v2259
      %v2390 = vpop.f32.mrf.mxu0
      %v2391 = vadd.f32 0.0, %v2390
      %v2392 = vpop.f32.mrf.mxu0
      %2393 = vmatprep.mubr.f32.mxu0 0.0
      %2394 = vmatmul.mubr.f32.gmra.mxu0 %v2262
      %v2395 = vpop.f32.mrf.mxu0
      %v2396 = vadd.f32 0.0, %v2395
      %v2397 = vpop.f32.mrf.mxu0
      %2398 = vmatprep.mubr.f32.mxu0 0.0
      %2399 = vmatmul.mubr.f32.gmra.mxu0 %v2265
      %v2400 = vpop.f32.mrf.mxu0
      %v2401 = vadd.f32 0.0, %v2400
      %v2402 = vpop.f32.mrf.mxu0
      %2403 = vmatprep.mubr.f32.mxu0 0.0
      %2404 = vmatmul.mubr.f32.gmra.mxu0 %v2268
      %v2405 = vpop.f32.mrf.mxu0
      %v2406 = vadd.f32 0.0, %v2405
      %v2407 = vpop.f32.mrf.mxu0
      %2408 = vmatprep.mubr.f32.mxu0 0.0
      %2409 = vmatmul.mubr.f32.gmra.mxu0 %v2271
      %v2410 = vpop.f32.mrf.mxu0
      %v2411 = vadd.f32 0.0, %v2410
      %v2412 = vpop.f32.mrf.mxu0
      %2413 = vmatprep.mubr.f32.mxu0 0.0
      %2414 = vmatmul.mubr.f32.gmra.mxu0 %v2274
      %v2415 = vpop.f32.mrf.mxu0
      %v2416 = vadd.f32 0.0, %v2415
      %v2417 = vpop.f32.mrf.mxu0
      %2418 = vmatprep.mubr.f32.mxu0 0.0
      %2419 = vmatmul.mubr.f32.gmra.mxu0 %v2277
      %v2420 = vpop.f32.mrf.mxu0
      %v2421 = vadd.f32 0.0, %v2420
      %v2422 = vpop.f32.mrf.mxu0
      %2423 = vdwg.mxu0
      %v2424 = vadd.f32 %v2132, %v2346
      %v2425 = vadd.f32 %v2137, %v2351
      %v2426 = vadd.f32 %v2142, %v2356
      %v2427 = vadd.f32 %v2147, %v2361
      %v2428 = vadd.f32 %v2152, %v2366
      %v2429 = vadd.f32 %v2157, %v2371
      %v2430 = vadd.f32 %v2162, %v2376
      %v2431 = vadd.f32 %v2167, %v2381
      %v2432 = vadd.f32 %v2172, %v2386
      %v2433 = vadd.f32 %v2177, %v2391
      %v2434 = vadd.f32 %v2182, %v2396
      %v2435 = vadd.f32 %v2187, %v2401
      %v2436 = vadd.f32 %v2192, %v2406
      %v2437 = vadd.f32 %v2197, %v2411
      %v2438 = vadd.f32 %v2202, %v2416
      %v2439 = vadd.f32 %v2207, %v2421
      %v2440 = vld [vmem:[%s1683] sm:$0xff]
      %v2441 = vld [vmem:[%s1683 + $0x8] sm:$0xff]
      %v2442 = vld [vmem:[%s1683 + $0x10] sm:$0xff]
      %v2443 = vld [vmem:[%s1683 + $0x18] sm:$0xff]
      %v2444 = vld [vmem:[%s1683 + $0x20] sm:$0xff]
      %v2445 = vld [vmem:[%s1683 + $0x28] sm:$0xff]
      %v2446 = vld [vmem:[%s1683 + $0x30] sm:$0xff]
      %v2447 = vld [vmem:[%s1683 + $0x38] sm:$0xff]
      %v2448 = vld [vmem:[%s1683 + $0x40] sm:$0xff]
      %v2449 = vld [vmem:[%s1683 + $0x48] sm:$0xff]
      %v2450 = vld [vmem:[%s1683 + $0x50] sm:$0xff]
      %v2451 = vld [vmem:[%s1683 + $0x58] sm:$0xff]
      %v2452 = vld [vmem:[%s1683 + $0x60] sm:$0xff]
      %v2453 = vld [vmem:[%s1683 + $0x68] sm:$0xff]
      %v2454 = vld [vmem:[%s1683 + $0x70] sm:$0xff]
      %v2455 = vld [vmem:[%s1683 + $0x78] sm:$0xff]
      %s2456 = scalar_lea.vmem %s4, 72
      %v2457 = vld [vmem:[%s2456] sm:$0xff]
      %v2458 = vld [vmem:[%s2456 + $0x8] sm:$0xff]
      %v2459 = vld [vmem:[%s2456 + $0x10] sm:$0xff]
      %v2461 = vsel %vm1823, %v2440, 0
      %v2464 = vsel %vm1823, %v2441, 0
      %v2467 = vsel %vm1823, %v2442, 0
      %v2470 = vsel %vm1823, %v2443, 0
      %v2473 = vsel %vm1823, %v2444, 0
      %v2476 = vsel %vm1823, %v2445, 0
      %v2479 = vsel %vm1823, %v2446, 0
      %v2482 = vsel %vm1823, %v2447, 0
      %v2485 = vsel %vm1823, %v2448, 0
      %v2488 = vsel %vm1823, %v2449, 0
      %v2491 = vsel %vm1823, %v2450, 0
      %v2494 = vsel %vm1823, %v2451, 0
      %v2497 = vsel %vm1823, %v2452, 0
      %v2500 = vsel %vm1823, %v2453, 0
      %v2503 = vsel %vm1823, %v2454, 0
      %v2506 = vsel %vm1823, %v2455, 0
      %2508 = vmatprep.subr.mxu0 0.0
      %2509 = vmatpush1.msra.mxu0 0.0
      %2510 = vmatprep.subr.mxu0 0.0
      %2511 = vmatpush1.msra.mxu0 0.0
      %2512 = vmatprep.subr.mxu0 0.0
      %2513 = vmatpush1.msra.mxu0 0.0
      %2514 = vmatprep.subr.mxu0 0.0
      %2515 = vmatpush1.msra.mxu0 0.0
      %2516 = vmatprep.subr.mxu0 0.0
      %2517 = vmatpush1.msra.mxu0 0.0
      %2518 = vmatprep.subr.mxu0 0.0
      %2519 = vmatpush1.msra.mxu0 0.0
      %2520 = vmatprep.subr.mxu0 0.0
      %2521 = vmatpush1.msra.mxu0 0.0
      %2522 = vmatprep.subr.mxu0 0.0
      %2523 = vmatpush1.msra.mxu0 0.0
      %2524 = vmatprep.subr.mxu0 0.0
      %2525 = vmatpush1.msra.mxu0 0.0
      %2526 = vmatprep.subr.mxu0 0.0
      %2527 = vmatpush1.msra.mxu0 0.0
      %2528 = vmatprep.subr.mxu0 0.0
      %2529 = vmatpush1.msra.mxu0 0.0
      %2530 = vmatprep.subr.mxu0 0.0
      %2531 = vmatpush1.msra.mxu0 0.0
      %2532 = vmatprep.subr.mxu0 0.0
      %2533 = vmatpush1.msra.mxu0 0.0
      %2534 = vmatprep.subr.mxu0 0.0
      %2535 = vmatpush1.msra.mxu0 %v2459
      %2536 = vmatprep.subr.mxu0 0.0
      %2537 = vmatpush1.msra.mxu0 %v2458
      %2538 = vmatprep.subr.mxu0 0.0
      %2539 = vmatpush1.msra.mxu0 %v2457
      %2540 = vmatprep.subr.mxu0 0.0
      %2541 = vmatpush2.msra.mxu0 0.0
      %2542 = vmatprep.subr.mxu0 0.0
      %2543 = vmatpush2.msra.mxu0 0.0
      %2544 = vmatprep.subr.mxu0 0.0
      %2545 = vmatpush2.msra.mxu0 0.0
      %2546 = vmatprep.subr.mxu0 0.0
      %2547 = vmatpush2.msra.mxu0 0.0
      %2548 = vmatprep.subr.mxu0 0.0
      %2549 = vmatpush2.msra.mxu0 0.0
      %2550 = vmatprep.subr.mxu0 0.0
      %2551 = vmatpush2.msra.mxu0 0.0
      %2552 = vmatprep.subr.mxu0 0.0
      %2553 = vmatpush2.msra.mxu0 0.0
      %2554 = vmatprep.subr.mxu0 0.0
      %2555 = vmatpush2.msra.mxu0 0.0
      %2556 = vmatprep.subr.mxu0 0.0
      %2557 = vmatpush2.msra.mxu0 0.0
      %2558 = vmatprep.subr.mxu0 0.0
      %2559 = vmatpush2.msra.mxu0 0.0
      %2560 = vmatprep.subr.mxu0 0.0
      %2561 = vmatpush2.msra.mxu0 0.0
      %2562 = vmatprep.subr.mxu0 0.0
      %2563 = vmatpush2.msra.mxu0 0.0
      %2564 = vmatprep.subr.mxu0 0.0
      %2565 = vmatpush2.msra.mxu0 0.0
      %2566 = vmatprep.subr.mxu0 0.0
      %2567 = vmatpush2.msra.mxu0 0.0
      %2568 = vmatprep.subr.mxu0 0.0
      %2569 = vmatpush2.msra.mxu0 0.0
      %2570 = vmatprep.subr.mxu0 0.0
      %2571 = vmatpush2.msra.mxu0 0.0
      %2572 = vmatprep.mubr.f32.mxu0 0.0
      %2573 = vmatmul.mubr.f32.gmra.mxu0 %v2461
      %v2574 = vpop.f32.mrf.mxu0
      %v2575 = vadd.f32 0.0, %v2574
      %v2576 = vpop.f32.mrf.mxu0
      %2577 = vmatprep.mubr.f32.mxu0 0.0
      %2578 = vmatmul.mubr.f32.gmra.mxu0 %v2464
      %v2579 = vpop.f32.mrf.mxu0
      %v2580 = vadd.f32 0.0, %v2579
      %v2581 = vpop.f32.mrf.mxu0
      %2582 = vmatprep.mubr.f32.mxu0 0.0
      %2583 = vmatmul.mubr.f32.gmra.mxu0 %v2467
      %v2584 = vpop.f32.mrf.mxu0
      %v2585 = vadd.f32 0.0, %v2584
      %v2586 = vpop.f32.mrf.mxu0
      %2587 = vmatprep.mubr.f32.mxu0 0.0
      %2588 = vmatmul.mubr.f32.gmra.mxu0 %v2470
      %v2589 = vpop.f32.mrf.mxu0
      %v2590 = vadd.f32 0.0, %v2589
      %v2591 = vpop.f32.mrf.mxu0
      %2592 = vmatprep.mubr.f32.mxu0 0.0
      %2593 = vmatmul.mubr.f32.gmra.mxu0 %v2473
      %v2594 = vpop.f32.mrf.mxu0
      %v2595 = vadd.f32 0.0, %v2594
      %v2596 = vpop.f32.mrf.mxu0
      %2597 = vmatprep.mubr.f32.mxu0 0.0
      %2598 = vmatmul.mubr.f32.gmra.mxu0 %v2476
      %v2599 = vpop.f32.mrf.mxu0
      %v2600 = vadd.f32 0.0, %v2599
      %v2601 = vpop.f32.mrf.mxu0
      %2602 = vmatprep.mubr.f32.mxu0 0.0
      %2603 = vmatmul.mubr.f32.gmra.mxu0 %v2479
      %v2604 = vpop.f32.mrf.mxu0
      %v2605 = vadd.f32 0.0, %v2604
      %v2606 = vpop.f32.mrf.mxu0
      %2607 = vmatprep.mubr.f32.mxu0 0.0
      %2608 = vmatmul.mubr.f32.gmra.mxu0 %v2482
      %v2609 = vpop.f32.mrf.mxu0
      %v2610 = vadd.f32 0.0, %v2609
      %v2611 = vpop.f32.mrf.mxu0
      %2612 = vmatprep.mubr.f32.mxu0 0.0
      %2613 = vmatmul.mubr.f32.gmra.mxu0 %v2485
      %v2614 = vpop.f32.mrf.mxu0
      %v2615 = vadd.f32 0.0, %v2614
      %v2616 = vpop.f32.mrf.mxu0
      %2617 = vmatprep.mubr.f32.mxu0 0.0
      %2618 = vmatmul.mubr.f32.gmra.mxu0 %v2488
      %v2619 = vpop.f32.mrf.mxu0
      %v2620 = vadd.f32 0.0, %v2619
      %v2621 = vpop.f32.mrf.mxu0
      %2622 = vmatprep.mubr.f32.mxu0 0.0
      %2623 = vmatmul.mubr.f32.gmra.mxu0 %v2491
      %v2624 = vpop.f32.mrf.mxu0
      %v2625 = vadd.f32 0.0, %v2624
      %v2626 = vpop.f32.mrf.mxu0
      %2627 = vmatprep.mubr.f32.mxu0 0.0
      %2628 = vmatmul.mubr.f32.gmra.mxu0 %v2494
      %v2629 = vpop.f32.mrf.mxu0
      %v2630 = vadd.f32 0.0, %v2629
      %v2631 = vpop.f32.mrf.mxu0
      %2632 = vmatprep.mubr.f32.mxu0 0.0
      %2633 = vmatmul.mubr.f32.gmra.mxu0 %v2497
      %v2634 = vpop.f32.mrf.mxu0
      %v2635 = vadd.f32 0.0, %v2634
      %v2636 = vpop.f32.mrf.mxu0
      %2637 = vmatprep.mubr.f32.mxu0 0.0
      %2638 = vmatmul.mubr.f32.gmra.mxu0 %v2500
      %v2639 = vpop.f32.mrf.mxu0
      %v2640 = vadd.f32 0.0, %v2639
      %v2641 = vpop.f32.mrf.mxu0
      %2642 = vmatprep.mubr.f32.mxu0 0.0
      %2643 = vmatmul.mubr.f32.gmra.mxu0 %v2503
      %v2644 = vpop.f32.mrf.mxu0
      %v2645 = vadd.f32 0.0, %v2644
      %v2646 = vpop.f32.mrf.mxu0
      %2647 = vmatprep.mubr.f32.mxu0 0.0
      %2648 = vmatmul.mubr.f32.gmra.mxu0 %v2506
      %v2649 = vpop.f32.mrf.mxu0
      %v2650 = vadd.f32 0.0, %v2649
      %v2651 = vpop.f32.mrf.mxu0
      %2652 = vdwg.mxu0
      %v2653 = vadd.f32 %v2424, %v2575
      %v2654 = vadd.f32 %v2425, %v2580
      %v2655 = vadd.f32 %v2426, %v2585
      %v2656 = vadd.f32 %v2427, %v2590
      %v2657 = vadd.f32 %v2428, %v2595
      %v2658 = vadd.f32 %v2429, %v2600
      %v2659 = vadd.f32 %v2430, %v2605
      %v2660 = vadd.f32 %v2431, %v2610
      %v2661 = vadd.f32 %v2432, %v2615
      %v2662 = vadd.f32 %v2433, %v2620
      %v2663 = vadd.f32 %v2434, %v2625
      %v2664 = vadd.f32 %v2435, %v2630
      %v2665 = vadd.f32 %v2436, %v2635
      %v2666 = vadd.f32 %v2437, %v2640
      %v2667 = vadd.f32 %v2438, %v2645
      %v2668 = vadd.f32 %v2439, %v2650
      %v2669 = vld [vmem:[%s5] sm:$0x1]
      %v2671 = vlaneseq
      %v2672 = vshrl.u32 %v2671, 7
      %v2673 = vsub.s32 0, %v2672
      %v2674 = vrot.slane %v2669, %v2673
      %v2676 = vadd.f32 %v2653, %v2674
      %v2677 = vadd.f32 %v2654, %v2674
      %v2678 = vadd.f32 %v2655, %v2674
      %v2679 = vadd.f32 %v2656, %v2674
      %v2680 = vadd.f32 %v2657, %v2674
      %v2681 = vadd.f32 %v2658, %v2674
      %v2682 = vadd.f32 %v2659, %v2674
      %v2683 = vadd.f32 %v2660, %v2674
      %v2684 = vadd.f32 %v2661, %v2674
      %v2685 = vadd.f32 %v2662, %v2674
      %v2686 = vadd.f32 %v2663, %v2674
      %v2687 = vadd.f32 %v2664, %v2674
      %v2688 = vadd.f32 %v2665, %v2674
      %v2689 = vadd.f32 %v2666, %v2674
      %v2690 = vadd.f32 %v2667, %v2674
      %v2691 = vadd.f32 %v2668, %v2674
      %vm2692 = vcmp.gt.f32.partialorder %v2676, 0.0
      %vm2693 = vcmp.gt.f32.partialorder %v2677, 0.0
      %vm2694 = vcmp.gt.f32.partialorder %v2678, 0.0
      %vm2695 = vcmp.gt.f32.partialorder %v2679, 0.0
      %vm2696 = vcmp.gt.f32.partialorder %v2680, 0.0
      %vm2697 = vcmp.gt.f32.partialorder %v2681, 0.0
      %vm2698 = vcmp.gt.f32.partialorder %v2682, 0.0
      %vm2699 = vcmp.gt.f32.partialorder %v2683, 0.0
      %vm2700 = vcmp.gt.f32.partialorder %v2684, 0.0
      %vm2701 = vcmp.gt.f32.partialorder %v2685, 0.0
      %vm2702 = vcmp.gt.f32.partialorder %v2686, 0.0
      %vm2703 = vcmp.gt.f32.partialorder %v2687, 0.0
      %vm2704 = vcmp.gt.f32.partialorder %v2688, 0.0
      %vm2705 = vcmp.gt.f32.partialorder %v2689, 0.0
      %vm2706 = vcmp.gt.f32.partialorder %v2690, 0.0
      %vm2707 = vcmp.gt.f32.partialorder %v2691, 0.0
      %v2708 = vmul.f32 %v2676, 1.442695
      %v2709 = vpow.pop %v2708
      %v2710 = vmul.f32 %v2677, 1.442695
      %v2711 = vpow.pop %v2710
      %v2712 = vmul.f32 %v2678, 1.442695
      %v2713 = vpow.pop %v2712
      %v2714 = vmul.f32 %v2679, 1.442695
      %v2715 = vpow.pop %v2714
      %v2716 = vmul.f32 %v2680, 1.442695
      %v2717 = vpow.pop %v2716
      %v2718 = vmul.f32 %v2681, 1.442695
      %v2719 = vpow.pop %v2718
      %v2720 = vmul.f32 %v2682, 1.442695
      %v2721 = vpow.pop %v2720
      %v2722 = vmul.f32 %v2683, 1.442695
      %v2723 = vpow.pop %v2722
      %v2724 = vmul.f32 %v2684, 1.442695
      %v2725 = vpow.pop %v2724
      %v2726 = vmul.f32 %v2685, 1.442695
      %v2727 = vpow.pop %v2726
      %v2728 = vmul.f32 %v2686, 1.442695
      %v2729 = vpow.pop %v2728
      %v2730 = vmul.f32 %v2687, 1.442695
      %v2731 = vpow.pop %v2730
      %v2732 = vmul.f32 %v2688, 1.442695
      %v2733 = vpow.pop %v2732
      %v2734 = vmul.f32 %v2689, 1.442695
      %v2735 = vpow.pop %v2734
      %v2736 = vmul.f32 %v2690, 1.442695
      %v2737 = vpow.pop %v2736
      %v2738 = vmul.f32 %v2691, 1.442695
      %v2739 = vpow.pop %v2738
      %v2740 = vsub.f32 %v2709, 1.0
      %v2741 = vsub.f32 %v2711, 1.0
      %v2742 = vsub.f32 %v2713, 1.0
      %v2743 = vsub.f32 %v2715, 1.0
      %v2744 = vsub.f32 %v2717, 1.0
      %v2745 = vsub.f32 %v2719, 1.0
      %v2746 = vsub.f32 %v2721, 1.0
      %v2747 = vsub.f32 %v2723, 1.0
      %v2748 = vsub.f32 %v2725, 1.0
      %v2749 = vsub.f32 %v2727, 1.0
      %v2750 = vsub.f32 %v2729, 1.0
      %v2751 = vsub.f32 %v2731, 1.0
      %v2752 = vsub.f32 %v2733, 1.0
      %v2753 = vsub.f32 %v2735, 1.0
      %v2754 = vsub.f32 %v2737, 1.0
      %v2755 = vsub.f32 %v2739, 1.0
      %v2756 = vsel %vm2692, %v2676, %v2740
      %v2757 = vsel %vm2693, %v2677, %v2741
      %v2758 = vsel %vm2694, %v2678, %v2742
      %v2759 = vsel %vm2695, %v2679, %v2743
      %v2760 = vsel %vm2696, %v2680, %v2744
      %v2761 = vsel %vm2697, %v2681, %v2745
      %v2762 = vsel %vm2698, %v2682, %v2746
      %v2763 = vsel %vm2699, %v2683, %v2747
      %v2764 = vsel %vm2700, %v2684, %v2748
      %v2765 = vsel %vm2701, %v2685, %v2749
      %v2766 = vsel %vm2702, %v2686, %v2750
      %v2767 = vsel %vm2703, %v2687, %v2751
      %v2768 = vsel %vm2704, %v2688, %v2752
      %v2769 = vsel %vm2705, %v2689, %v2753
      %v2770 = vsel %vm2706, %v2690, %v2754
      %v2771 = vsel %vm2707, %v2691, %v2755
      %v2772 = vadd.f32 %v2756, %v1603
      %v2773 = vadd.f32 %v2757, %v1604
      %v2774 = vadd.f32 %v2758, %v1605
      %v2775 = vadd.f32 %v2759, %v1606
      %v2776 = vadd.f32 %v2760, %v1607
      %v2777 = vadd.f32 %v2761, %v1608
      %v2778 = vadd.f32 %v2762, %v1609
      %v2779 = vadd.f32 %v2763, %v1610
      %v2780 = vadd.f32 %v2764, %v1611
      %v2781 = vadd.f32 %v2765, %v1612
      %v2782 = vadd.f32 %v2766, %v1613
      %v2783 = vadd.f32 %v2767, %v1614
      %v2784 = vadd.f32 %v2768, %v1615
      %v2785 = vadd.f32 %v2769, %v1616
      %v2786 = vadd.f32 %v2770, %v1617
      %v2787 = vadd.f32 %v2771, %v1618
      %2788 = vxpose.xlu0.b32.start [1/16] %v2772, 128
      %2789 = vxpose.xlu0.b32.cont [2/16] %v2773, 128
      %2790 = vxpose.xlu0.b32.cont [3/16] %v2774, 128
      %2791 = vxpose.xlu0.b32.cont [4/16] %v2775, 128
      %2792 = vxpose.xlu0.b32.cont [5/16] %v2776, 128
      %2793 = vxpose.xlu0.b32.cont [6/16] %v2777, 128
      %2794 = vxpose.xlu0.b32.cont [7/16] %v2778, 128
      %2795 = vxpose.xlu0.b32.cont [8/16] %v2779, 128
      %2796 = vxpose.xlu0.b32.cont [9/16] %v2780, 128
      %2797 = vxpose.xlu0.b32.cont [10/16] %v2781, 128
      %2798 = vxpose.xlu0.b32.cont [11/16] %v2782, 128
      %2799 = vxpose.xlu0.b32.cont [12/16] %v2783, 128
      %2800 = vxpose.xlu0.b32.cont [13/16] %v2784, 128
      %2801 = vxpose.xlu0.b32.cont [14/16] %v2785, 128
      %2802 = vxpose.xlu0.b32.cont [15/16] %v2786, 128
      %2803 = vxpose.xlu0.b32.end [16/16] %v2787, 128
      %v2804 = vpop.trf.xlu0
      %v2805 = vpop.trf.xlu0
      %v2806 = vpop.trf.xlu0
      %v2807 = vpop.trf.xlu0
      %v2808 = vpop.trf.xlu0
      %v2809 = vpop.trf.xlu0
      %v2810 = vpop.trf.xlu0
      %v2811 = vpop.trf.xlu0
      %v2812 = vpop.trf.xlu0
      %v2813 = vpop.trf.xlu0
      %v2814 = vpop.trf.xlu0
      %v2815 = vpop.trf.xlu0
      %v2816 = vpop.trf.xlu0
      %v2817 = vpop.trf.xlu0
      %v2818 = vpop.trf.xlu0
      %v2819 = vpop.trf.xlu0
      %2820 = vst [vmem:[%s323] sm:$0xff] %v2804
      %p2821 = scmp.lt.s32.totalorder %s21, 1
      %s2822 = scalar_select %p2821, %s21, 1
      %p2823 = scmp.lt.s32.totalorder %s22, 1
      %s2824 = scalar_select %p2823, %s22, 1
      %s2825 = smul.addr %s2822, 2
      %s2826 = sadd.s32 %s2824, %s2825
      %s2827 = smul.addr %s2826, 8
      %s2828 = scalar_lea.vmem %s6, %s2827
      // Predicated region
      $region53: #{encoder_block.1} parent=43 // pred_check
        %p2829 = pneg %p189
      $region54: #{encoder_block.1} parent=43 // pred_check_branch
        %2831 = sbr.rel (%p2829) target = $region56
      $region55: #{encoder_block.1} parent=43 // pred_region
        _
      $region56: #{encoder_block.1} parent=43 // pred_fallthru
        _
    $region44: #{encoder_block.1} parent=5 // pred_fallthru
      _
    %p2832 = scmp.le.s32.totalorder 2, %s12
    // Predicated region
    $region57: #{encoder_block.1} parent=5 // pred_check
      %p2833 = pneg %p2832
    $region58: #{encoder_block.1} parent=5 // pred_check_branch
      %2835 = sbr.rel (%p2833) target = $region60
    $region59: #{encoder_block.1} parent=5 // pred_region
      %s2836 = ssub.s32 %s12, 2
      // Predicated region
      $region61: #{encoder_block.1} parent=59 // pred_check
        %p2837 = pneg %p195
      $region62: #{encoder_block.1} parent=59 // pred_check_branch
        %2839 = sbr.rel (%p2837) target = $region64
      $region63: #{encoder_block.1} parent=59 // pred_region
        %p2840 = scmp.lt.s32.totalorder %s23, 1
        %s2841 = scalar_select %p2840, %s23, 1
        %p2842 = scmp.lt.s32.totalorder %s24, 1
        %s2843 = scalar_select %p2842, %s24, 1
        %s2844 = smul.addr %s2841, 2
        %s2845 = sadd.s32 %s2843, %s2844
        %s2846 = smul.addr %s2845, 8
        %s2847 = scalar_lea.vmem %s6, %s2846
      $region64: #{encoder_block.1} parent=59 // pred_fallthru
        _
    $region60: #{encoder_block.1} parent=5 // pred_fallthru
      _
  $region6: #{encoder_block.1} parent=0 // loop_footer
    %s16 = sadd.s32 1, %s12
  $region7: #{encoder_block.1} parent=0 // loop_footer_branch
    %11 = sbr.rel target = $region3
  $region8: #{encoder_block.1} parent=0 // loop_exit
    _

</llo_original>
